<compile_context>
chip_gen: v7x
topology: tpu7x:2x2x1
jax: 0.10.0
libtpu: 0.0.40
codegen_flags: <defaults>
</compile_context>

<pallas_src>
import jax
import jax.numpy as jnp
from jax import lax
from jax.experimental import pallas as pl
from jax.experimental.pallas import tpu as pltpu

NUM_CLASSES = 10
IN_FEATURES = 7168  # 7 * 32 * 32


def _classifier_kernel(x_ref, w_ref, b_ref, o_ref):
    # x_ref: [B, K] flattened features (VMEM)
    # w_ref: [N, K] linear weight in native PyTorch layout (VMEM, lane-dense)
    # b_ref: [1, N] bias (VMEM)
    # o_ref: [B, N] softmax probabilities (VMEM)
    x = x_ref[...]
    w = w_ref[...]
    b = b_ref[...]

    # Linear: logits[b, n] = sum_k x[b, k] * w[n, k] + b[n]
    # Contract on K (axis 1 of both operands); MXU handles the transposed RHS
    # natively, f32 accumulation.
    logits = lax.dot_general(
        x, w,
        dimension_numbers=(((1,), (1,)), ((), ())),
        preferred_element_type=jnp.float32,
    ) + b

    # Softmax over dim=1 (numerically stable).
    m = jnp.max(logits, axis=-1, keepdims=True)
    e = jnp.exp(logits - m)
    s = jnp.sum(e, axis=-1, keepdims=True)
    o_ref[...] = (e / s).astype(o_ref.dtype)


def classifier_forward(features, weight, bias):
    """features: [B, C, H, W] float32; weight: [N, K] (PyTorch layout); bias: [N]."""
    B = features.shape[0]
    x = features.reshape(B, -1)                     # nn.Flatten()
    assert x.shape[1] == IN_FEATURES
    b2d = bias.reshape(1, NUM_CLASSES)

    # Single-shot kernel: no grid, whole arrays resident in VMEM
    # (total footprint ~0.4 MiB, far below any generation's VMEM budget).
    return pl.pallas_call(
        _classifier_kernel,
        out_shape=jax.ShapeDtypeStruct((B, NUM_CLASSES), jnp.float32),
        in_specs=[
            pl.BlockSpec(memory_space=pltpu.MemorySpace.VMEM),
            pl.BlockSpec(memory_space=pltpu.MemorySpace.VMEM),
            pl.BlockSpec(memory_space=pltpu.MemorySpace.VMEM),
        ],
        out_specs=pl.BlockSpec(memory_space=pltpu.MemorySpace.VMEM),
    )(x, weight, b2d)


if __name__ == "__main__":
    key = jax.random.PRNGKey(0)
    k_x, k_w, k_b = jax.random.split(key, 3)

    # Small, deterministic inputs: batch=2, C=7, H=W=32  ->  C*H*W = 7168
    features = jax.random.normal(k_x, (2, 7, 32, 32), dtype=jnp.float32)

    # Deterministic parameter init (mimics nn.Linear's U(-1/sqrt(K), 1/sqrt(K)))
    bound = 1.0 / (IN_FEATURES ** 0.5)
    weight = jax.random.uniform(
        k_w, (NUM_CLASSES, IN_FEATURES), dtype=jnp.float32, minval=-bound, maxval=bound
    )
    bias = jax.random.uniform(
        k_b, (NUM_CLASSES,), dtype=jnp.float32, minval=-bound, maxval=bound
    )

    out = classifier_forward(features, weight, bias)
    out = jax.block_until_ready(out)

    # Sanity checks: shape, probabilities sum to 1, matches pure-JAX reference.
    assert out.shape == (2, NUM_CLASSES)
    assert jnp.allclose(jnp.sum(out, axis=1), 1.0, atol=1e-5)
    ref = jax.nn.softmax(features.reshape(2, -1) @ weight.T + bias, axis=1)
    assert jnp.allclose(out, ref, atol=1e-5)

    print("KERNEL_OK")
</pallas_src>

<mosaic_0001>
module attributes {stable_mosaic.version = 11 : i64} {
  func.func @_classifier_kernel(%arg0: memref<2x7168xf32, #tpu.memory_space<vmem>>, %arg1: memref<10x7168xf32, #tpu.memory_space<vmem>>, %arg2: memref<1x10xf32, #tpu.memory_space<vmem>>, %arg3: memref<2x10xf32, #tpu.memory_space<vmem>>) attributes {dimension_semantics = [], scalar_prefetch = 0 : i64, scratch_operands = 0 : i64, tpu.core_type = #tpu.core_type<tc>} {
    %c0 = arith.constant 0 : index
    %c0_0 = arith.constant 0 : index
    %0 = vector.load %arg0[%c0, %c0_0] : memref<2x7168xf32, #tpu.memory_space<vmem>>, vector<2x7168xf32>
    %c0_1 = arith.constant 0 : index
    %c0_2 = arith.constant 0 : index
    %1 = vector.load %arg1[%c0_1, %c0_2] : memref<10x7168xf32, #tpu.memory_space<vmem>>, vector<10x7168xf32>
    %c0_3 = arith.constant 0 : index
    %c0_4 = arith.constant 0 : index
    %2 = vector.load %arg2[%c0_3, %c0_4] : memref<1x10xf32, #tpu.memory_space<vmem>>, vector<1x10xf32>
    %cst = arith.constant dense<0.000000e+00> : vector<2x10xf32>
    %3 = tpu.matmul %0, %1, %cst {dimension_numbers = #tpu.dot_dimension_numbers<[1], [1], [0], [0], [0, 0, 1, 0], [], []>} : vector<2x7168xf32>, vector<10x7168xf32>, vector<2x10xf32> -> vector<2x10xf32>
    %4 = vector.broadcast %2 : vector<1x10xf32> to vector<2x10xf32>
    %5 = arith.addf %3, %4 : vector<2x10xf32>
    %cst_5 = arith.constant dense<0xFF800000> : vector<2xf32>
    %6 = vector.multi_reduction <maximumf>, %5, %cst_5 [1] : vector<2x10xf32> to vector<2xf32>
    %7 = vector.shape_cast %6 : vector<2xf32> to vector<2x1xf32>
    %8 = vector.broadcast %7 : vector<2x1xf32> to vector<2x10xf32>
    %9 = arith.subf %5, %8 : vector<2x10xf32>
    %10 = math.exp %9 : vector<2x10xf32>
    %cst_6 = arith.constant dense<0.000000e+00> : vector<2xf32>
    %11 = vector.multi_reduction <add>, %10, %cst_6 [1] : vector<2x10xf32> to vector<2xf32>
    %12 = vector.shape_cast %11 : vector<2xf32> to vector<2x1xf32>
    %13 = vector.broadcast %12 : vector<2x1xf32> to vector<2x10xf32>
    %14 = arith.divf %10, %13 : vector<2x10xf32>
    %c0_7 = arith.constant 0 : index
    %c0_8 = arith.constant 0 : index
    %15 = vector.load %arg3[%c0_7, %c0_8] : memref<2x10xf32, #tpu.memory_space<vmem>>, vector<2x10xf32>
    tpu.vector_store %arg3[%c0_7, %c0_8], %14 {strides = array<i32>} : memref<2x10xf32, #tpu.memory_space<vmem>>, vector<2x10xf32>,
    return
  }
}

</mosaic_0001>

<llo_original>
// kernel: tpu_custom_call.1
$region0: #{tpu_custom_call.1}
  #allocation0 [shape = 'u32[]', space=smem, size = 0x4, offset = 0x4, fixed_abs, tag = 'smem constant byte address 0x4 - core index']
  #allocation1 [shape = 'u32[144,128]{1,0:T(1,128)}', space=vmem, size = 0x12000, scoped, tag = 'internal scratch']
  %s0 = inlined_call_operand.hbm [shape: f32[2,7168], index: 0, kind: input, shape index: {}]
  %s1 = inlined_call_operand.hbm [shape: f32[10,7168], index: 1, kind: input, shape index: {}]
  %s2 = inlined_call_operand.vmem [shape: f32[1,10], index: 2, kind: input, shape index: {}]
  %s3 = inlined_call_operand.hbm [shape: f32[2,10], index: 3, kind: output, shape index: {}]
  %s4 = sld [smem:[#allocation0]]
  $region30: #{tpu_custom_call.1} parent=0
    _
  %s6 = ssub.s32 1, %s4
  %s7 = scalar_select 0, %s6, %s4
  $region1: #{tpu_custom_call.1} parent=0
    #allocation2 [shape = 'u8[57344]{0}', space=vmem, size = 0xe000, scoped, tag = 'input window, operand 0, single buffered']
    #allocation3 [shape = 's32[1]{0}', space=sflag, size = 0x4, scoped, tag = 'scoped memory for tpu_custom_call.1']
    #allocation4 [shape = 's32[1]{0}', space=sflag, size = 0x4, scoped, tag = 'scoped memory for tpu_custom_call.1']
    #allocation5 [shape = 'u8[458752]{0}', space=vmem, size = 0x70000, scoped, tag = 'input window, operand 1, single buffered']
    #allocation6 [shape = 's32[1]{0}', space=sflag, size = 0x4, scoped, tag = 'scoped memory for tpu_custom_call.1']
    #allocation7 [shape = 'u8[1024]{0}', space=vmem, size = 0x400, scoped, tag = 'output window, operand 0, single buffered']
    %8 = vsyncpa [#allocation3], 0
    %9 = vsyncpa [#allocation6], 0
    %10 = vsyncpa [#allocation4], 0
    // Predicated region
    $region2: #{tpu_custom_call.1} parent=1 // pred_check
      _
    $region3: #{tpu_custom_call.1} parent=1 // pred_check_branch
      %12 = sbr.rel (0) target = $region5
    $region4: #{tpu_custom_call.1} parent=1 // pred_region
      %s14 = ssub.s32 1792, 1792
      %15 = vsyncadd [#allocation3], %s14
      %s17 = sshll.u32 [#allocation2], 4
      %s18 = int_to_ptr.vmem [resolvable:$true] %s17
      %20 = dma.hbm_to_vmem [thread:$0]  %s0, 1792, %s18, [#allocation3]
    $region5: #{tpu_custom_call.1} parent=1 // pred_fallthru
      _
    // Predicated region
    $region6: #{tpu_custom_call.1} parent=1 // pred_check
      _
    $region7: #{tpu_custom_call.1} parent=1 // pred_check_branch
      %22 = sbr.rel (0) target = $region9
    $region8: #{tpu_custom_call.1} parent=1 // pred_region
      %s24 = ssub.s32 14336, 14336
      %25 = vsyncadd [#allocation6], %s24
      %s26 = sshll.u32 [#allocation5], 4
      %s27 = int_to_ptr.vmem [resolvable:$true] %s26
      %32 = dma.hbm_to_vmem [thread:$0]  %s1, 14336, %s27, [#allocation6], 7168, 7168, 448
    $region9: #{tpu_custom_call.1} parent=1 // pred_fallthru
      _
    // Predicated region
    $region10: #{tpu_custom_call.1} parent=1 // pred_check
      _
    $region11: #{tpu_custom_call.1} parent=1 // pred_check_branch
      %34 = sbr.rel (0) target = $region13
    $region12: #{tpu_custom_call.1} parent=1 // pred_region
      _
    $region13: #{tpu_custom_call.1} parent=1 // pred_fallthru
      _
    // Predicated region
    $region14: #{tpu_custom_call.1} parent=1 // pred_check
      _
    $region15: #{tpu_custom_call.1} parent=1 // pred_check_branch
      %36 = sbr.rel (0) target = $region17
    $region16: #{tpu_custom_call.1} parent=1 // pred_region
      %37 = dma.done [#allocation3], 1792
    $region17: #{tpu_custom_call.1} parent=1 // pred_fallthru
      _
    // Predicated region
    $region18: #{tpu_custom_call.1} parent=1 // pred_check
      _
    $region19: #{tpu_custom_call.1} parent=1 // pred_check_branch
      %39 = sbr.rel (0) target = $region21
    $region20: #{tpu_custom_call.1} parent=1 // pred_region
      %40 = dma.done [#allocation6], 14336
    $region21: #{tpu_custom_call.1} parent=1 // pred_fallthru
      _
    %v41 = vld [vmem:[#allocation2] sm:$0xff]
    %v42 = vld [vmem:[#allocation2 + $0x8] sm:$0xff]
    %v43 = vld [vmem:[#allocation2 + $0x10] sm:$0xff]
    %v44 = vld [vmem:[#allocation2 + $0x18] sm:$0xff]
    %v45 = vld [vmem:[#allocation2 + $0x20] sm:$0xff]
    %v46 = vld [vmem:[#allocation2 + $0x28] sm:$0xff]
    %v47 = vld [vmem:[#allocation2 + $0x30] sm:$0xff]
    %v48 = vld [vmem:[#allocation2 + $0x38] sm:$0xff]
    %v49 = vld [vmem:[#allocation2 + $0x40] sm:$0xff]
    %v50 = vld [vmem:[#allocation2 + $0x48] sm:$0xff]
    %v51 = vld [vmem:[#allocation2 + $0x50] sm:$0xff]
    %v52 = vld [vmem:[#allocation2 + $0x58] sm:$0xff]
    %v53 = vld [vmem:[#allocation2 + $0x60] sm:$0xff]
    %v54 = vld [vmem:[#allocation2 + $0x68] sm:$0xff]
    %v55 = vld [vmem:[#allocation5] sm:$0xff]
    %v56 = vld [vmem:[#allocation5 + $0x8] sm:$0xff]
    %v57 = vld [vmem:[#allocation5 + $0x10] sm:$0xff]
    %v58 = vld [vmem:[#allocation5 + $0x18] sm:$0xff]
    %v59 = vld [vmem:[#allocation5 + $0x20] sm:$0xff]
    %v60 = vld [vmem:[#allocation5 + $0x28] sm:$0xff]
    %v61 = vld [vmem:[#allocation5 + $0x30] sm:$0xff]
    %v62 = vld [vmem:[#allocation5 + $0x38] sm:$0xff]
    %v63 = vld [vmem:[#allocation5 + $0x40] sm:$0xff]
    %v64 = vld [vmem:[#allocation5 + $0x48] sm:$0xff]
    %v65 = vld [vmem:[#allocation5 + $0x50] sm:$0xff]
    %v66 = vld [vmem:[#allocation5 + $0x58] sm:$0xff]
    %v67 = vld [vmem:[#allocation5 + $0x60] sm:$0xff]
    %v68 = vld [vmem:[#allocation5 + $0x68] sm:$0xff]
    %v69 = vld [vmem:[#allocation5 + $0x70] sm:$0xff]
    %v70 = vld [vmem:[#allocation5 + $0x78] sm:$0xff]
    %v71 = vld [vmem:[#allocation5 + $0x80] sm:$0xff]
    %v72 = vld [vmem:[#allocation5 + $0x88] sm:$0xff]
    %v73 = vld [vmem:[#allocation5 + $0x90] sm:$0xff]
    %v74 = vld [vmem:[#allocation5 + $0x98] sm:$0xff]
    %v75 = vld [vmem:[#allocation5 + $0xa0] sm:$0xff]
    %v76 = vld [vmem:[#allocation5 + $0xa8] sm:$0xff]
    %v77 = vld [vmem:[#allocation5 + $0xb0] sm:$0xff]
    %v78 = vld [vmem:[#allocation5 + $0xb8] sm:$0xff]
    %v79 = vld [vmem:[#allocation5 + $0xc0] sm:$0xff]
    %v80 = vld [vmem:[#allocation5 + $0xc8] sm:$0xff]
    %v81 = vld [vmem:[#allocation5 + $0xd0] sm:$0xff]
    %v82 = vld [vmem:[#allocation5 + $0xd8] sm:$0xff]
    %v83 = vld [vmem:[#allocation5 + $0xe0] sm:$0xff]
    %v84 = vld [vmem:[#allocation5 + $0xe8] sm:$0xff]
    %v85 = vld [vmem:[#allocation5 + $0xf0] sm:$0xff]
    %v86 = vld [vmem:[#allocation5 + $0xf8] sm:$0xff]
    %v87 = vld [vmem:[#allocation5 + $0x100] sm:$0xff]
    %v88 = vld [vmem:[#allocation5 + $0x108] sm:$0xff]
    %v89 = vld [vmem:[#allocation5 + $0x110] sm:$0xff]
    %v90 = vld [vmem:[#allocation5 + $0x118] sm:$0xff]
    %v91 = vld [vmem:[#allocation5 + $0x120] sm:$0xff]
    %v92 = vld [vmem:[#allocation5 + $0x128] sm:$0xff]
    %v93 = vld [vmem:[#allocation5 + $0x130] sm:$0xff]
    %v94 = vld [vmem:[#allocation5 + $0x138] sm:$0xff]
    %v95 = vld [vmem:[#allocation5 + $0x140] sm:$0xff]
    %v96 = vld [vmem:[#allocation5 + $0x148] sm:$0xff]
    %v97 = vld [vmem:[#allocation5 + $0x150] sm:$0xff]
    %v98 = vld [vmem:[#allocation5 + $0x158] sm:$0xff]
    %v99 = vld [vmem:[#allocation5 + $0x160] sm:$0xff]
    %v100 = vld [vmem:[#allocation5 + $0x168] sm:$0xff]
    %v101 = vld [vmem:[#allocation5 + $0x170] sm:$0xff]
    %v102 = vld [vmem:[#allocation5 + $0x178] sm:$0xff]
    %v103 = vld [vmem:[#allocation5 + $0x180] sm:$0xff]
    %v104 = vld [vmem:[#allocation5 + $0x188] sm:$0xff]
    %v105 = vld [vmem:[#allocation5 + $0x190] sm:$0xff]
    %v106 = vld [vmem:[#allocation5 + $0x198] sm:$0xff]
    %v107 = vld [vmem:[#allocation5 + $0x1a0] sm:$0xff]
    %v108 = vld [vmem:[#allocation5 + $0x1a8] sm:$0xff]
    %v109 = vld [vmem:[#allocation5 + $0x1b0] sm:$0xff]
    %v110 = vld [vmem:[#allocation5 + $0x1b8] sm:$0xff]
    %v111 = vld [vmem:[#allocation5 + $0x1c0] sm:$0x3]
    %v112 = vld [vmem:[#allocation5 + $0x1c8] sm:$0x3]
    %v113 = vld [vmem:[#allocation5 + $0x1d0] sm:$0x3]
    %v114 = vld [vmem:[#allocation5 + $0x1d8] sm:$0x3]
    %v115 = vld [vmem:[#allocation5 + $0x1e0] sm:$0x3]
    %v116 = vld [vmem:[#allocation5 + $0x1e8] sm:$0x3]
    %v117 = vld [vmem:[#allocation5 + $0x1f0] sm:$0x3]
    %v118 = vld [vmem:[#allocation5 + $0x1f8] sm:$0x3]
    %v119 = vld [vmem:[#allocation5 + $0x200] sm:$0x3]
    %v120 = vld [vmem:[#allocation5 + $0x208] sm:$0x3]
    %v121 = vld [vmem:[#allocation5 + $0x210] sm:$0x3]
    %v122 = vld [vmem:[#allocation5 + $0x218] sm:$0x3]
    %v123 = vld [vmem:[#allocation5 + $0x220] sm:$0x3]
    %v124 = vld [vmem:[#allocation5 + $0x228] sm:$0x3]
    %v125 = vld [vmem:[#allocation5 + $0x230] sm:$0x3]
    %v126 = vld [vmem:[#allocation5 + $0x238] sm:$0x3]
    %v127 = vld [vmem:[#allocation5 + $0x240] sm:$0x3]
    %v128 = vld [vmem:[#allocation5 + $0x248] sm:$0x3]
    %v129 = vld [vmem:[#allocation5 + $0x250] sm:$0x3]
    %v130 = vld [vmem:[#allocation5 + $0x258] sm:$0x3]
    %v131 = vld [vmem:[#allocation5 + $0x260] sm:$0x3]
    %v132 = vld [vmem:[#allocation5 + $0x268] sm:$0x3]
    %v133 = vld [vmem:[#allocation5 + $0x270] sm:$0x3]
    %v134 = vld [vmem:[#allocation5 + $0x278] sm:$0x3]
    %v135 = vld [vmem:[#allocation5 + $0x280] sm:$0x3]
    %v136 = vld [vmem:[#allocation5 + $0x288] sm:$0x3]
    %v137 = vld [vmem:[#allocation5 + $0x290] sm:$0x3]
    %v138 = vld [vmem:[#allocation5 + $0x298] sm:$0x3]
    %v139 = vld [vmem:[#allocation5 + $0x2a0] sm:$0x3]
    %v140 = vld [vmem:[#allocation5 + $0x2a8] sm:$0x3]
    %v141 = vld [vmem:[#allocation5 + $0x2b0] sm:$0x3]
    %v142 = vld [vmem:[#allocation5 + $0x2b8] sm:$0x3]
    %v143 = vld [vmem:[#allocation5 + $0x2c0] sm:$0x3]
    %v144 = vld [vmem:[#allocation5 + $0x2c8] sm:$0x3]
    %v145 = vld [vmem:[#allocation5 + $0x2d0] sm:$0x3]
    %v146 = vld [vmem:[#allocation5 + $0x2d8] sm:$0x3]
    %v147 = vld [vmem:[#allocation5 + $0x2e0] sm:$0x3]
    %v148 = vld [vmem:[#allocation5 + $0x2e8] sm:$0x3]
    %v149 = vld [vmem:[#allocation5 + $0x2f0] sm:$0x3]
    %v150 = vld [vmem:[#allocation5 + $0x2f8] sm:$0x3]
    %v151 = vld [vmem:[#allocation5 + $0x300] sm:$0x3]
    %v152 = vld [vmem:[#allocation5 + $0x308] sm:$0x3]
    %v153 = vld [vmem:[#allocation5 + $0x310] sm:$0x3]
    %v154 = vld [vmem:[#allocation5 + $0x318] sm:$0x3]
    %v155 = vld [vmem:[#allocation5 + $0x320] sm:$0x3]
    %v156 = vld [vmem:[#allocation5 + $0x328] sm:$0x3]
    %v157 = vld [vmem:[#allocation5 + $0x330] sm:$0x3]
    %v158 = vld [vmem:[#allocation5 + $0x338] sm:$0x3]
    %v159 = vld [vmem:[#allocation5 + $0x340] sm:$0x3]
    %v160 = vld [vmem:[#allocation5 + $0x348] sm:$0x3]
    %v161 = vld [vmem:[#allocation5 + $0x350] sm:$0x3]
    %v162 = vld [vmem:[#allocation5 + $0x358] sm:$0x3]
    %v163 = vld [vmem:[#allocation5 + $0x360] sm:$0x3]
    %v164 = vld [vmem:[#allocation5 + $0x368] sm:$0x3]
    %v165 = vld [vmem:[#allocation5 + $0x370] sm:$0x3]
    %v166 = vld [vmem:[#allocation5 + $0x378] sm:$0x3]
    %v167 = vld [vmem:[%s2] sm:$0x1]
    %v169 = vlaneseq
    %v170 = vshrl.u32 %v169, 7
    %v171 = vsub.s32 0, %v170
    %v172 = vrot.slane %v167, %v171
    %v188 = vcombine.high %v41, %v41
    %v190 = vunpack.c.l.s4 1983009808
    %v191 = vunpack.c.0.s8 %v190
    %v192 = vlaneseq
    %v193 = vshrl.u32 %v192, 7
    %v194 = vsub.s32 %v191, %v193
    %v195 = vrot.slane %v41, %v194
    %v197 = vunpack.c.l.s4 1983009808
    %v198 = vunpack.c.0.s8 %v197
    %v199 = vlaneseq
    %v200 = vshrl.u32 %v199, 7
    %v201 = vsub.s32 %v198, %v200
    %v202 = vrot.slane %v188, %v201
    %v203 = vcombine.high %v195, %v195
    %v204 = vcombine.high %v202, %v202
    %v205 = vcombine.high %v42, %v42
    %v207 = vunpack.c.l.s4 1983009808
    %v208 = vunpack.c.0.s8 %v207
    %v209 = vlaneseq
    %v210 = vshrl.u32 %v209, 7
    %v211 = vsub.s32 %v208, %v210
    %v212 = vrot.slane %v42, %v211
    %v214 = vunpack.c.l.s4 1983009808
    %v215 = vunpack.c.0.s8 %v214
    %v216 = vlaneseq
    %v217 = vshrl.u32 %v216, 7
    %v218 = vsub.s32 %v215, %v217
    %v219 = vrot.slane %v205, %v218
    %v220 = vcombine.high %v212, %v212
    %v221 = vcombine.high %v219, %v219
    %v222 = vcombine.high %v43, %v43
    %v224 = vunpack.c.l.s4 1983009808
    %v225 = vunpack.c.0.s8 %v224
    %v226 = vlaneseq
    %v227 = vshrl.u32 %v226, 7
    %v228 = vsub.s32 %v225, %v227
    %v229 = vrot.slane %v43, %v228
    %v231 = vunpack.c.l.s4 1983009808
    %v232 = vunpack.c.0.s8 %v231
    %v233 = vlaneseq
    %v234 = vshrl.u32 %v233, 7
    %v235 = vsub.s32 %v232, %v234
    %v236 = vrot.slane %v222, %v235
    %v237 = vcombine.high %v229, %v229
    %v238 = vcombine.high %v236, %v236
    %v239 = vcombine.high %v44, %v44
    %v241 = vunpack.c.l.s4 1983009808
    %v242 = vunpack.c.0.s8 %v241
    %v243 = vlaneseq
    %v244 = vshrl.u32 %v243, 7
    %v245 = vsub.s32 %v242, %v244
    %v246 = vrot.slane %v44, %v245
    %v248 = vunpack.c.l.s4 1983009808
    %v249 = vunpack.c.0.s8 %v248
    %v250 = vlaneseq
    %v251 = vshrl.u32 %v250, 7
    %v252 = vsub.s32 %v249, %v251
    %v253 = vrot.slane %v239, %v252
    %v254 = vcombine.high %v246, %v246
    %v255 = vcombine.high %v253, %v253
    %v256 = vcombine.high %v45, %v45
    %v258 = vunpack.c.l.s4 1983009808
    %v259 = vunpack.c.0.s8 %v258
    %v260 = vlaneseq
    %v261 = vshrl.u32 %v260, 7
    %v262 = vsub.s32 %v259, %v261
    %v263 = vrot.slane %v45, %v262
    %v265 = vunpack.c.l.s4 1983009808
    %v266 = vunpack.c.0.s8 %v265
    %v267 = vlaneseq
    %v268 = vshrl.u32 %v267, 7
    %v269 = vsub.s32 %v266, %v268
    %v270 = vrot.slane %v256, %v269
    %v271 = vcombine.high %v263, %v263
    %v272 = vcombine.high %v270, %v270
    %v273 = vcombine.high %v46, %v46
    %v275 = vunpack.c.l.s4 1983009808
    %v276 = vunpack.c.0.s8 %v275
    %v277 = vlaneseq
    %v278 = vshrl.u32 %v277, 7
    %v279 = vsub.s32 %v276, %v278
    %v280 = vrot.slane %v46, %v279
    %v282 = vunpack.c.l.s4 1983009808
    %v283 = vunpack.c.0.s8 %v282
    %v284 = vlaneseq
    %v285 = vshrl.u32 %v284, 7
    %v286 = vsub.s32 %v283, %v285
    %v287 = vrot.slane %v273, %v286
    %v288 = vcombine.high %v280, %v280
    %v289 = vcombine.high %v287, %v287
    %v290 = vcombine.high %v47, %v47
    %v292 = vunpack.c.l.s4 1983009808
    %v293 = vunpack.c.0.s8 %v292
    %v294 = vlaneseq
    %v295 = vshrl.u32 %v294, 7
    %v296 = vsub.s32 %v293, %v295
    %v297 = vrot.slane %v47, %v296
    %v299 = vunpack.c.l.s4 1983009808
    %v300 = vunpack.c.0.s8 %v299
    %v301 = vlaneseq
    %v302 = vshrl.u32 %v301, 7
    %v303 = vsub.s32 %v300, %v302
    %v304 = vrot.slane %v290, %v303
    %v305 = vcombine.high %v297, %v297
    %v306 = vcombine.high %v304, %v304
    %v307 = vcombine.high %v48, %v48
    %v309 = vunpack.c.l.s4 1983009808
    %v310 = vunpack.c.0.s8 %v309
    %v311 = vlaneseq
    %v312 = vshrl.u32 %v311, 7
    %v313 = vsub.s32 %v310, %v312
    %v314 = vrot.slane %v48, %v313
    %v316 = vunpack.c.l.s4 1983009808
    %v317 = vunpack.c.0.s8 %v316
    %v318 = vlaneseq
    %v319 = vshrl.u32 %v318, 7
    %v320 = vsub.s32 %v317, %v319
    %v321 = vrot.slane %v307, %v320
    %v322 = vcombine.high %v314, %v314
    %v323 = vcombine.high %v321, %v321
    %v324 = vcombine.high %v49, %v49
    %v326 = vunpack.c.l.s4 1983009808
    %v327 = vunpack.c.0.s8 %v326
    %v328 = vlaneseq
    %v329 = vshrl.u32 %v328, 7
    %v330 = vsub.s32 %v327, %v329
    %v331 = vrot.slane %v49, %v330
    %v333 = vunpack.c.l.s4 1983009808
    %v334 = vunpack.c.0.s8 %v333
    %v335 = vlaneseq
    %v336 = vshrl.u32 %v335, 7
    %v337 = vsub.s32 %v334, %v336
    %v338 = vrot.slane %v324, %v337
    %v339 = vcombine.high %v331, %v331
    %v340 = vcombine.high %v338, %v338
    %v341 = vcombine.high %v50, %v50
    %v343 = vunpack.c.l.s4 1983009808
    %v344 = vunpack.c.0.s8 %v343
    %v345 = vlaneseq
    %v346 = vshrl.u32 %v345, 7
    %v347 = vsub.s32 %v344, %v346
    %v348 = vrot.slane %v50, %v347
    %v350 = vunpack.c.l.s4 1983009808
    %v351 = vunpack.c.0.s8 %v350
    %v352 = vlaneseq
    %v353 = vshrl.u32 %v352, 7
    %v354 = vsub.s32 %v351, %v353
    %v355 = vrot.slane %v341, %v354
    %v356 = vcombine.high %v348, %v348
    %v357 = vcombine.high %v355, %v355
    %v358 = vcombine.high %v51, %v51
    %v360 = vunpack.c.l.s4 1983009808
    %v361 = vunpack.c.0.s8 %v360
    %v362 = vlaneseq
    %v363 = vshrl.u32 %v362, 7
    %v364 = vsub.s32 %v361, %v363
    %v365 = vrot.slane %v51, %v364
    %v367 = vunpack.c.l.s4 1983009808
    %v368 = vunpack.c.0.s8 %v367
    %v369 = vlaneseq
    %v370 = vshrl.u32 %v369, 7
    %v371 = vsub.s32 %v368, %v370
    %v372 = vrot.slane %v358, %v371
    %v373 = vcombine.high %v365, %v365
    %v374 = vcombine.high %v372, %v372
    %v375 = vcombine.high %v52, %v52
    %v377 = vunpack.c.l.s4 1983009808
    %v378 = vunpack.c.0.s8 %v377
    %v379 = vlaneseq
    %v380 = vshrl.u32 %v379, 7
    %v381 = vsub.s32 %v378, %v380
    %v382 = vrot.slane %v52, %v381
    %v384 = vunpack.c.l.s4 1983009808
    %v385 = vunpack.c.0.s8 %v384
    %v386 = vlaneseq
    %v387 = vshrl.u32 %v386, 7
    %v388 = vsub.s32 %v385, %v387
    %v389 = vrot.slane %v375, %v388
    %v390 = vcombine.high %v382, %v382
    %v391 = vcombine.high %v389, %v389
    %v392 = vcombine.high %v53, %v53
    %v394 = vunpack.c.l.s4 1983009808
    %v395 = vunpack.c.0.s8 %v394
    %v396 = vlaneseq
    %v397 = vshrl.u32 %v396, 7
    %v398 = vsub.s32 %v395, %v397
    %v399 = vrot.slane %v53, %v398
    %v401 = vunpack.c.l.s4 1983009808
    %v402 = vunpack.c.0.s8 %v401
    %v403 = vlaneseq
    %v404 = vshrl.u32 %v403, 7
    %v405 = vsub.s32 %v402, %v404
    %v406 = vrot.slane %v392, %v405
    %v407 = vcombine.high %v399, %v399
    %v408 = vcombine.high %v406, %v406
    %v409 = vcombine.high %v54, %v54
    %v411 = vunpack.c.l.s4 1983009808
    %v412 = vunpack.c.0.s8 %v411
    %v413 = vlaneseq
    %v414 = vshrl.u32 %v413, 7
    %v415 = vsub.s32 %v412, %v414
    %v416 = vrot.slane %v54, %v415
    %v418 = vunpack.c.l.s4 1983009808
    %v419 = vunpack.c.0.s8 %v418
    %v420 = vlaneseq
    %v421 = vshrl.u32 %v420, 7
    %v422 = vsub.s32 %v419, %v421
    %v423 = vrot.slane %v409, %v422
    %v424 = vcombine.high %v416, %v416
    %v425 = vcombine.high %v423, %v423
    %482 = vmatprep.subr.mxu0 %v56
    %483 = vmatpush1.xpose.msra.mxu0 %v55
    %484 = vmatprep.subr.mxu0 %v112
    %485 = vmatpush1.xpose.msra.mxu0 %v111
    %486 = vmatprep.subr.mxu0 0.0
    %487 = vmatpush1.xpose.msra.mxu0 0.0
    %488 = vmatprep.subr.mxu0 0.0
    %489 = vmatpush1.xpose.msra.mxu0 0.0
    %490 = vmatprep.subr.mxu0 0.0
    %491 = vmatpush1.xpose.msra.mxu0 0.0
    %492 = vmatprep.subr.mxu0 0.0
    %493 = vmatpush1.xpose.msra.mxu0 0.0
    %494 = vmatprep.subr.mxu0 0.0
    %495 = vmatpush1.xpose.msra.mxu0 0.0
    %496 = vmatprep.subr.mxu0 0.0
    %497 = vmatpush1.xpose.msra.mxu0 0.0
    %498 = vmatprep.subr.mxu0 0.0
    %499 = vmatpush1.xpose.msra.mxu0 0.0
    %500 = vmatprep.subr.mxu0 0.0
    %501 = vmatpush1.xpose.msra.mxu0 0.0
    %502 = vmatprep.subr.mxu0 0.0
    %503 = vmatpush1.xpose.msra.mxu0 0.0
    %504 = vmatprep.subr.mxu0 0.0
    %505 = vmatpush1.xpose.msra.mxu0 0.0
    %506 = vmatprep.subr.mxu0 0.0
    %507 = vmatpush1.xpose.msra.mxu0 0.0
    %508 = vmatprep.subr.mxu0 0.0
    %509 = vmatpush1.xpose.msra.mxu0 0.0
    %510 = vmatprep.subr.mxu0 0.0
    %511 = vmatpush1.xpose.msra.mxu0 0.0
    %512 = vmatprep.subr.mxu0 0.0
    %513 = vmatpush1.xpose.msra.mxu0 0.0
    %514 = vmatprep.subr.mxu0 0.0
    %515 = vmatpush1.xpose.msra.mxu0 0.0
    %516 = vmatprep.subr.mxu0 0.0
    %517 = vmatpush1.xpose.msra.mxu0 0.0
    %518 = vmatprep.subr.mxu0 0.0
    %519 = vmatpush1.xpose.msra.mxu0 0.0
    %520 = vmatprep.subr.mxu0 0.0
    %521 = vmatpush1.xpose.msra.mxu0 0.0
    %522 = vmatprep.subr.mxu0 0.0
    %523 = vmatpush1.xpose.msra.mxu0 0.0
    %524 = vmatprep.subr.mxu0 0.0
    %525 = vmatpush1.xpose.msra.mxu0 0.0
    %526 = vmatprep.subr.mxu0 0.0
    %527 = vmatpush1.xpose.msra.mxu0 0.0
    %528 = vmatprep.subr.mxu0 0.0
    %529 = vmatpush1.xpose.msra.mxu0 0.0
    %530 = vmatprep.subr.mxu0 0.0
    %531 = vmatpush1.xpose.msra.mxu0 0.0
    %532 = vmatprep.subr.mxu0 0.0
    %533 = vmatpush1.xpose.msra.mxu0 0.0
    %534 = vmatprep.subr.mxu0 0.0
    %535 = vmatpush1.xpose.msra.mxu0 0.0
    %536 = vmatprep.subr.mxu0 0.0
    %537 = vmatpush1.xpose.msra.mxu0 0.0
    %538 = vmatprep.subr.mxu0 0.0
    %539 = vmatpush1.xpose.msra.mxu0 0.0
    %540 = vmatprep.subr.mxu0 0.0
    %541 = vmatpush1.xpose.msra.mxu0 0.0
    %542 = vmatprep.subr.mxu0 0.0
    %543 = vmatpush1.xpose.msra.mxu0 0.0
    %544 = vmatprep.subr.mxu0 0.0
    %545 = vmatpush1.xpose.msra.mxu0 0.0
    %546 = vmatprep.mubr.f32.mxu0 %v203
    %547 = vmatmul.mubr.f32.gmra.mrb[0].mxu0 %v195
    %v548 = vpop.f32.mrb[0].mxu0
    %v549 = vadd.f32 %v172, %v548
    %v550 = vpop.f32.mrb[0].mxu0
    %551 = vdwg.mxu0
    %552 = vmatprep.subr.mxu0 %v58
    %553 = vmatpush1.xpose.msra.mxu0 %v57
    %554 = vmatprep.subr.mxu0 %v114
    %555 = vmatpush1.xpose.msra.mxu0 %v113
    %556 = vmatprep.subr.mxu0 0.0
    %557 = vmatpush1.xpose.msra.mxu0 0.0
    %558 = vmatprep.subr.mxu0 0.0
    %559 = vmatpush1.xpose.msra.mxu0 0.0
    %560 = vmatprep.subr.mxu0 0.0
    %561 = vmatpush1.xpose.msra.mxu0 0.0
    %562 = vmatprep.subr.mxu0 0.0
    %563 = vmatpush1.xpose.msra.mxu0 0.0
    %564 = vmatprep.subr.mxu0 0.0
    %565 = vmatpush1.xpose.msra.mxu0 0.0
    %566 = vmatprep.subr.mxu0 0.0
    %567 = vmatpush1.xpose.msra.mxu0 0.0
    %568 = vmatprep.subr.mxu0 0.0
    %569 = vmatpush1.xpose.msra.mxu0 0.0
    %570 = vmatprep.subr.mxu0 0.0
    %571 = vmatpush1.xpose.msra.mxu0 0.0
    %572 = vmatprep.subr.mxu0 0.0
    %573 = vmatpush1.xpose.msra.mxu0 0.0
    %574 = vmatprep.subr.mxu0 0.0
    %575 = vmatpush1.xpose.msra.mxu0 0.0
    %576 = vmatprep.subr.mxu0 0.0
    %577 = vmatpush1.xpose.msra.mxu0 0.0
    %578 = vmatprep.subr.mxu0 0.0
    %579 = vmatpush1.xpose.msra.mxu0 0.0
    %580 = vmatprep.subr.mxu0 0.0
    %581 = vmatpush1.xpose.msra.mxu0 0.0
    %582 = vmatprep.subr.mxu0 0.0
    %583 = vmatpush1.xpose.msra.mxu0 0.0
    %584 = vmatprep.subr.mxu0 0.0
    %585 = vmatpush1.xpose.msra.mxu0 0.0
    %586 = vmatprep.subr.mxu0 0.0
    %587 = vmatpush1.xpose.msra.mxu0 0.0
    %588 = vmatprep.subr.mxu0 0.0
    %589 = vmatpush1.xpose.msra.mxu0 0.0
    %590 = vmatprep.subr.mxu0 0.0
    %591 = vmatpush1.xpose.msra.mxu0 0.0
    %592 = vmatprep.subr.mxu0 0.0
    %593 = vmatpush1.xpose.msra.mxu0 0.0
    %594 = vmatprep.subr.mxu0 0.0
    %595 = vmatpush1.xpose.msra.mxu0 0.0
    %596 = vmatprep.subr.mxu0 0.0
    %597 = vmatpush1.xpose.msra.mxu0 0.0
    %598 = vmatprep.subr.mxu0 0.0
    %599 = vmatpush1.xpose.msra.mxu0 0.0
    %600 = vmatprep.subr.mxu0 0.0
    %601 = vmatpush1.xpose.msra.mxu0 0.0
    %602 = vmatprep.subr.mxu0 0.0
    %603 = vmatpush1.xpose.msra.mxu0 0.0
    %604 = vmatprep.subr.mxu0 0.0
    %605 = vmatpush1.xpose.msra.mxu0 0.0
    %606 = vmatprep.subr.mxu0 0.0
    %607 = vmatpush1.xpose.msra.mxu0 0.0
    %608 = vmatprep.subr.mxu0 0.0
    %609 = vmatpush1.xpose.msra.mxu0 0.0
    %610 = vmatprep.subr.mxu0 0.0
    %611 = vmatpush1.xpose.msra.mxu0 0.0
    %612 = vmatprep.subr.mxu0 0.0
    %613 = vmatpush1.xpose.msra.mxu0 0.0
    %614 = vmatprep.subr.mxu0 0.0
    %615 = vmatpush1.xpose.msra.mxu0 0.0
    %616 = vmatprep.mubr.f32.mxu0 %v204
    %617 = vmatmul.mubr.f32.gmra.mrb[0].mxu0 %v202
    %v618 = vpop.f32.mrb[0].mxu0
    %v619 = vadd.f32 %v549, %v618
    %v620 = vpop.f32.mrb[0].mxu0
    %621 = vdwg.mxu0
    %622 = vmatprep.subr.mxu0 %v60
    %623 = vmatpush1.xpose.msra.mxu0 %v59
    %624 = vmatprep.subr.mxu0 %v116
    %625 = vmatpush1.xpose.msra.mxu0 %v115
    %626 = vmatprep.subr.mxu0 0.0
    %627 = vmatpush1.xpose.msra.mxu0 0.0
    %628 = vmatprep.subr.mxu0 0.0
    %629 = vmatpush1.xpose.msra.mxu0 0.0
    %630 = vmatprep.subr.mxu0 0.0
    %631 = vmatpush1.xpose.msra.mxu0 0.0
    %632 = vmatprep.subr.mxu0 0.0
    %633 = vmatpush1.xpose.msra.mxu0 0.0
    %634 = vmatprep.subr.mxu0 0.0
    %635 = vmatpush1.xpose.msra.mxu0 0.0
    %636 = vmatprep.subr.mxu0 0.0
    %637 = vmatpush1.xpose.msra.mxu0 0.0
    %638 = vmatprep.subr.mxu0 0.0
    %639 = vmatpush1.xpose.msra.mxu0 0.0
    %640 = vmatprep.subr.mxu0 0.0
    %641 = vmatpush1.xpose.msra.mxu0 0.0
    %642 = vmatprep.subr.mxu0 0.0
    %643 = vmatpush1.xpose.msra.mxu0 0.0
    %644 = vmatprep.subr.mxu0 0.0
    %645 = vmatpush1.xpose.msra.mxu0 0.0
    %646 = vmatprep.subr.mxu0 0.0
    %647 = vmatpush1.xpose.msra.mxu0 0.0
    %648 = vmatprep.subr.mxu0 0.0
    %649 = vmatpush1.xpose.msra.mxu0 0.0
    %650 = vmatprep.subr.mxu0 0.0
    %651 = vmatpush1.xpose.msra.mxu0 0.0
    %652 = vmatprep.subr.mxu0 0.0
    %653 = vmatpush1.xpose.msra.mxu0 0.0
    %654 = vmatprep.subr.mxu0 0.0
    %655 = vmatpush1.xpose.msra.mxu0 0.0
    %656 = vmatprep.subr.mxu0 0.0
    %657 = vmatpush1.xpose.msra.mxu0 0.0
    %658 = vmatprep.subr.mxu0 0.0
    %659 = vmatpush1.xpose.msra.mxu0 0.0
    %660 = vmatprep.subr.mxu0 0.0
    %661 = vmatpush1.xpose.msra.mxu0 0.0
    %662 = vmatprep.subr.mxu0 0.0
    %663 = vmatpush1.xpose.msra.mxu0 0.0
    %664 = vmatprep.subr.mxu0 0.0
    %665 = vmatpush1.xpose.msra.mxu0 0.0
    %666 = vmatprep.subr.mxu0 0.0
    %667 = vmatpush1.xpose.msra.mxu0 0.0
    %668 = vmatprep.subr.mxu0 0.0
    %669 = vmatpush1.xpose.msra.mxu0 0.0
    %670 = vmatprep.subr.mxu0 0.0
    %671 = vmatpush1.xpose.msra.mxu0 0.0
    %672 = vmatprep.subr.mxu0 0.0
    %673 = vmatpush1.xpose.msra.mxu0 0.0
    %674 = vmatprep.subr.mxu0 0.0
    %675 = vmatpush1.xpose.msra.mxu0 0.0
    %676 = vmatprep.subr.mxu0 0.0
    %677 = vmatpush1.xpose.msra.mxu0 0.0
    %678 = vmatprep.subr.mxu0 0.0
    %679 = vmatpush1.xpose.msra.mxu0 0.0
    %680 = vmatprep.subr.mxu0 0.0
    %681 = vmatpush1.xpose.msra.mxu0 0.0
    %682 = vmatprep.subr.mxu0 0.0
    %683 = vmatpush1.xpose.msra.mxu0 0.0
    %684 = vmatprep.subr.mxu0 0.0
    %685 = vmatpush1.xpose.msra.mxu0 0.0
    %686 = vmatprep.mubr.f32.mxu0 %v220
    %687 = vmatmul.mubr.f32.gmra.mrb[0].mxu0 %v212
    %v688 = vpop.f32.mrb[0].mxu0
    %v689 = vadd.f32 %v619, %v688
    %v690 = vpop.f32.mrb[0].mxu0
    %691 = vdwg.mxu0
    %692 = vmatprep.subr.mxu0 %v62
    %693 = vmatpush1.xpose.msra.mxu0 %v61
    %694 = vmatprep.subr.mxu0 %v118
    %695 = vmatpush1.xpose.msra.mxu0 %v117
    %696 = vmatprep.subr.mxu0 0.0
    %697 = vmatpush1.xpose.msra.mxu0 0.0
    %698 = vmatprep.subr.mxu0 0.0
    %699 = vmatpush1.xpose.msra.mxu0 0.0
    %700 = vmatprep.subr.mxu0 0.0
    %701 = vmatpush1.xpose.msra.mxu0 0.0
    %702 = vmatprep.subr.mxu0 0.0
    %703 = vmatpush1.xpose.msra.mxu0 0.0
    %704 = vmatprep.subr.mxu0 0.0
    %705 = vmatpush1.xpose.msra.mxu0 0.0
    %706 = vmatprep.subr.mxu0 0.0
    %707 = vmatpush1.xpose.msra.mxu0 0.0
    %708 = vmatprep.subr.mxu0 0.0
    %709 = vmatpush1.xpose.msra.mxu0 0.0
    %710 = vmatprep.subr.mxu0 0.0
    %711 = vmatpush1.xpose.msra.mxu0 0.0
    %712 = vmatprep.subr.mxu0 0.0
    %713 = vmatpush1.xpose.msra.mxu0 0.0
    %714 = vmatprep.subr.mxu0 0.0
    %715 = vmatpush1.xpose.msra.mxu0 0.0
    %716 = vmatprep.subr.mxu0 0.0
    %717 = vmatpush1.xpose.msra.mxu0 0.0
    %718 = vmatprep.subr.mxu0 0.0
    %719 = vmatpush1.xpose.msra.mxu0 0.0
    %720 = vmatprep.subr.mxu0 0.0
    %721 = vmatpush1.xpose.msra.mxu0 0.0
    %722 = vmatprep.subr.mxu0 0.0
    %723 = vmatpush1.xpose.msra.mxu0 0.0
    %724 = vmatprep.subr.mxu0 0.0
    %725 = vmatpush1.xpose.msra.mxu0 0.0
    %726 = vmatprep.subr.mxu0 0.0
    %727 = vmatpush1.xpose.msra.mxu0 0.0
    %728 = vmatprep.subr.mxu0 0.0
    %729 = vmatpush1.xpose.msra.mxu0 0.0
    %730 = vmatprep.subr.mxu0 0.0
    %731 = vmatpush1.xpose.msra.mxu0 0.0
    %732 = vmatprep.subr.mxu0 0.0
    %733 = vmatpush1.xpose.msra.mxu0 0.0
    %734 = vmatprep.subr.mxu0 0.0
    %735 = vmatpush1.xpose.msra.mxu0 0.0
    %736 = vmatprep.subr.mxu0 0.0
    %737 = vmatpush1.xpose.msra.mxu0 0.0
    %738 = vmatprep.subr.mxu0 0.0
    %739 = vmatpush1.xpose.msra.mxu0 0.0
    %740 = vmatprep.subr.mxu0 0.0
    %741 = vmatpush1.xpose.msra.mxu0 0.0
    %742 = vmatprep.subr.mxu0 0.0
    %743 = vmatpush1.xpose.msra.mxu0 0.0
    %744 = vmatprep.subr.mxu0 0.0
    %745 = vmatpush1.xpose.msra.mxu0 0.0
    %746 = vmatprep.subr.mxu0 0.0
    %747 = vmatpush1.xpose.msra.mxu0 0.0
    %748 = vmatprep.subr.mxu0 0.0
    %749 = vmatpush1.xpose.msra.mxu0 0.0
    %750 = vmatprep.subr.mxu0 0.0
    %751 = vmatpush1.xpose.msra.mxu0 0.0
    %752 = vmatprep.subr.mxu0 0.0
    %753 = vmatpush1.xpose.msra.mxu0 0.0
    %754 = vmatprep.subr.mxu0 0.0
    %755 = vmatpush1.xpose.msra.mxu0 0.0
    %756 = vmatprep.mubr.f32.mxu0 %v221
    %757 = vmatmul.mubr.f32.gmra.mrb[0].mxu0 %v219
    %v758 = vpop.f32.mrb[0].mxu0
    %v759 = vadd.f32 %v689, %v758
    %v760 = vpop.f32.mrb[0].mxu0
    %761 = vdwg.mxu0
    %762 = vmatprep.subr.mxu0 %v64
    %763 = vmatpush1.xpose.msra.mxu0 %v63
    %764 = vmatprep.subr.mxu0 %v120
    %765 = vmatpush1.xpose.msra.mxu0 %v119
    %766 = vmatprep.subr.mxu0 0.0
    %767 = vmatpush1.xpose.msra.mxu0 0.0
    %768 = vmatprep.subr.mxu0 0.0
    %769 = vmatpush1.xpose.msra.mxu0 0.0
    %770 = vmatprep.subr.mxu0 0.0
    %771 = vmatpush1.xpose.msra.mxu0 0.0
    %772 = vmatprep.subr.mxu0 0.0
    %773 = vmatpush1.xpose.msra.mxu0 0.0
    %774 = vmatprep.subr.mxu0 0.0
    %775 = vmatpush1.xpose.msra.mxu0 0.0
    %776 = vmatprep.subr.mxu0 0.0
    %777 = vmatpush1.xpose.msra.mxu0 0.0
    %778 = vmatprep.subr.mxu0 0.0
    %779 = vmatpush1.xpose.msra.mxu0 0.0
    %780 = vmatprep.subr.mxu0 0.0
    %781 = vmatpush1.xpose.msra.mxu0 0.0
    %782 = vmatprep.subr.mxu0 0.0
    %783 = vmatpush1.xpose.msra.mxu0 0.0
    %784 = vmatprep.subr.mxu0 0.0
    %785 = vmatpush1.xpose.msra.mxu0 0.0
    %786 = vmatprep.subr.mxu0 0.0
    %787 = vmatpush1.xpose.msra.mxu0 0.0
    %788 = vmatprep.subr.mxu0 0.0
    %789 = vmatpush1.xpose.msra.mxu0 0.0
    %790 = vmatprep.subr.mxu0 0.0
    %791 = vmatpush1.xpose.msra.mxu0 0.0
    %792 = vmatprep.subr.mxu0 0.0
    %793 = vmatpush1.xpose.msra.mxu0 0.0
    %794 = vmatprep.subr.mxu0 0.0
    %795 = vmatpush1.xpose.msra.mxu0 0.0
    %796 = vmatprep.subr.mxu0 0.0
    %797 = vmatpush1.xpose.msra.mxu0 0.0
    %798 = vmatprep.subr.mxu0 0.0
    %799 = vmatpush1.xpose.msra.mxu0 0.0
    %800 = vmatprep.subr.mxu0 0.0
    %801 = vmatpush1.xpose.msra.mxu0 0.0
    %802 = vmatprep.subr.mxu0 0.0
    %803 = vmatpush1.xpose.msra.mxu0 0.0
    %804 = vmatprep.subr.mxu0 0.0
    %805 = vmatpush1.xpose.msra.mxu0 0.0
    %806 = vmatprep.subr.mxu0 0.0
    %807 = vmatpush1.xpose.msra.mxu0 0.0
    %808 = vmatprep.subr.mxu0 0.0
    %809 = vmatpush1.xpose.msra.mxu0 0.0
    %810 = vmatprep.subr.mxu0 0.0
    %811 = vmatpush1.xpose.msra.mxu0 0.0
    %812 = vmatprep.subr.mxu0 0.0
    %813 = vmatpush1.xpose.msra.mxu0 0.0
    %814 = vmatprep.subr.mxu0 0.0
    %815 = vmatpush1.xpose.msra.mxu0 0.0
    %816 = vmatprep.subr.mxu0 0.0
    %817 = vmatpush1.xpose.msra.mxu0 0.0
    %818 = vmatprep.subr.mxu0 0.0
    %819 = vmatpush1.xpose.msra.mxu0 0.0
    %820 = vmatprep.subr.mxu0 0.0
    %821 = vmatpush1.xpose.msra.mxu0 0.0
    %822 = vmatprep.subr.mxu0 0.0
    %823 = vmatpush1.xpose.msra.mxu0 0.0
    %824 = vmatprep.subr.mxu0 0.0
    %825 = vmatpush1.xpose.msra.mxu0 0.0
    %826 = vmatprep.mubr.f32.mxu0 %v237
    %827 = vmatmul.mubr.f32.gmra.mrb[0].mxu0 %v229
    %v828 = vpop.f32.mrb[0].mxu0
    %v829 = vadd.f32 %v759, %v828
    %v830 = vpop.f32.mrb[0].mxu0
    %831 = vdwg.mxu0
    %832 = vmatprep.subr.mxu0 %v66
    %833 = vmatpush1.xpose.msra.mxu0 %v65
    %834 = vmatprep.subr.mxu0 %v122
    %835 = vmatpush1.xpose.msra.mxu0 %v121
    %836 = vmatprep.subr.mxu0 0.0
    %837 = vmatpush1.xpose.msra.mxu0 0.0
    %838 = vmatprep.subr.mxu0 0.0
    %839 = vmatpush1.xpose.msra.mxu0 0.0
    %840 = vmatprep.subr.mxu0 0.0
    %841 = vmatpush1.xpose.msra.mxu0 0.0
    %842 = vmatprep.subr.mxu0 0.0
    %843 = vmatpush1.xpose.msra.mxu0 0.0
    %844 = vmatprep.subr.mxu0 0.0
    %845 = vmatpush1.xpose.msra.mxu0 0.0
    %846 = vmatprep.subr.mxu0 0.0
    %847 = vmatpush1.xpose.msra.mxu0 0.0
    %848 = vmatprep.subr.mxu0 0.0
    %849 = vmatpush1.xpose.msra.mxu0 0.0
    %850 = vmatprep.subr.mxu0 0.0
    %851 = vmatpush1.xpose.msra.mxu0 0.0
    %852 = vmatprep.subr.mxu0 0.0
    %853 = vmatpush1.xpose.msra.mxu0 0.0
    %854 = vmatprep.subr.mxu0 0.0
    %855 = vmatpush1.xpose.msra.mxu0 0.0
    %856 = vmatprep.subr.mxu0 0.0
    %857 = vmatpush1.xpose.msra.mxu0 0.0
    %858 = vmatprep.subr.mxu0 0.0
    %859 = vmatpush1.xpose.msra.mxu0 0.0
    %860 = vmatprep.subr.mxu0 0.0
    %861 = vmatpush1.xpose.msra.mxu0 0.0
    %862 = vmatprep.subr.mxu0 0.0
    %863 = vmatpush1.xpose.msra.mxu0 0.0
    %864 = vmatprep.subr.mxu0 0.0
    %865 = vmatpush1.xpose.msra.mxu0 0.0
    %866 = vmatprep.subr.mxu0 0.0
    %867 = vmatpush1.xpose.msra.mxu0 0.0
    %868 = vmatprep.subr.mxu0 0.0
    %869 = vmatpush1.xpose.msra.mxu0 0.0
    %870 = vmatprep.subr.mxu0 0.0
    %871 = vmatpush1.xpose.msra.mxu0 0.0
    %872 = vmatprep.subr.mxu0 0.0
    %873 = vmatpush1.xpose.msra.mxu0 0.0
    %874 = vmatprep.subr.mxu0 0.0
    %875 = vmatpush1.xpose.msra.mxu0 0.0
    %876 = vmatprep.subr.mxu0 0.0
    %877 = vmatpush1.xpose.msra.mxu0 0.0
    %878 = vmatprep.subr.mxu0 0.0
    %879 = vmatpush1.xpose.msra.mxu0 0.0
    %880 = vmatprep.subr.mxu0 0.0
    %881 = vmatpush1.xpose.msra.mxu0 0.0
    %882 = vmatprep.subr.mxu0 0.0
    %883 = vmatpush1.xpose.msra.mxu0 0.0
    %884 = vmatprep.subr.mxu0 0.0
    %885 = vmatpush1.xpose.msra.mxu0 0.0
    %886 = vmatprep.subr.mxu0 0.0
    %887 = vmatpush1.xpose.msra.mxu0 0.0
    %888 = vmatprep.subr.mxu0 0.0
    %889 = vmatpush1.xpose.msra.mxu0 0.0
    %890 = vmatprep.subr.mxu0 0.0
    %891 = vmatpush1.xpose.msra.mxu0 0.0
    %892 = vmatprep.subr.mxu0 0.0
    %893 = vmatpush1.xpose.msra.mxu0 0.0
    %894 = vmatprep.subr.mxu0 0.0
    %895 = vmatpush1.xpose.msra.mxu0 0.0
    %896 = vmatprep.mubr.f32.mxu0 %v238
    %897 = vmatmul.mubr.f32.gmra.mrb[0].mxu0 %v236
    %v898 = vpop.f32.mrb[0].mxu0
    %v899 = vadd.f32 %v829, %v898
    %v900 = vpop.f32.mrb[0].mxu0
    %901 = vdwg.mxu0
    %902 = vmatprep.subr.mxu0 %v68
    %903 = vmatpush1.xpose.msra.mxu0 %v67
    %904 = vmatprep.subr.mxu0 %v124
    %905 = vmatpush1.xpose.msra.mxu0 %v123
    %906 = vmatprep.subr.mxu0 0.0
    %907 = vmatpush1.xpose.msra.mxu0 0.0
    %908 = vmatprep.subr.mxu0 0.0
    %909 = vmatpush1.xpose.msra.mxu0 0.0
    %910 = vmatprep.subr.mxu0 0.0
    %911 = vmatpush1.xpose.msra.mxu0 0.0
    %912 = vmatprep.subr.mxu0 0.0
    %913 = vmatpush1.xpose.msra.mxu0 0.0
    %914 = vmatprep.subr.mxu0 0.0
    %915 = vmatpush1.xpose.msra.mxu0 0.0
    %916 = vmatprep.subr.mxu0 0.0
    %917 = vmatpush1.xpose.msra.mxu0 0.0
    %918 = vmatprep.subr.mxu0 0.0
    %919 = vmatpush1.xpose.msra.mxu0 0.0
    %920 = vmatprep.subr.mxu0 0.0
    %921 = vmatpush1.xpose.msra.mxu0 0.0
    %922 = vmatprep.subr.mxu0 0.0
    %923 = vmatpush1.xpose.msra.mxu0 0.0
    %924 = vmatprep.subr.mxu0 0.0
    %925 = vmatpush1.xpose.msra.mxu0 0.0
    %926 = vmatprep.subr.mxu0 0.0
    %927 = vmatpush1.xpose.msra.mxu0 0.0
    %928 = vmatprep.subr.mxu0 0.0
    %929 = vmatpush1.xpose.msra.mxu0 0.0
    %930 = vmatprep.subr.mxu0 0.0
    %931 = vmatpush1.xpose.msra.mxu0 0.0
    %932 = vmatprep.subr.mxu0 0.0
    %933 = vmatpush1.xpose.msra.mxu0 0.0
    %934 = vmatprep.subr.mxu0 0.0
    %935 = vmatpush1.xpose.msra.mxu0 0.0
    %936 = vmatprep.subr.mxu0 0.0
    %937 = vmatpush1.xpose.msra.mxu0 0.0
    %938 = vmatprep.subr.mxu0 0.0
    %939 = vmatpush1.xpose.msra.mxu0 0.0
    %940 = vmatprep.subr.mxu0 0.0
    %941 = vmatpush1.xpose.msra.mxu0 0.0
    %942 = vmatprep.subr.mxu0 0.0
    %943 = vmatpush1.xpose.msra.mxu0 0.0
    %944 = vmatprep.subr.mxu0 0.0
    %945 = vmatpush1.xpose.msra.mxu0 0.0
    %946 = vmatprep.subr.mxu0 0.0
    %947 = vmatpush1.xpose.msra.mxu0 0.0
    %948 = vmatprep.subr.mxu0 0.0
    %949 = vmatpush1.xpose.msra.mxu0 0.0
    %950 = vmatprep.subr.mxu0 0.0
    %951 = vmatpush1.xpose.msra.mxu0 0.0
    %952 = vmatprep.subr.mxu0 0.0
    %953 = vmatpush1.xpose.msra.mxu0 0.0
    %954 = vmatprep.subr.mxu0 0.0
    %955 = vmatpush1.xpose.msra.mxu0 0.0
    %956 = vmatprep.subr.mxu0 0.0
    %957 = vmatpush1.xpose.msra.mxu0 0.0
    %958 = vmatprep.subr.mxu0 0.0
    %959 = vmatpush1.xpose.msra.mxu0 0.0
    %960 = vmatprep.subr.mxu0 0.0
    %961 = vmatpush1.xpose.msra.mxu0 0.0
    %962 = vmatprep.subr.mxu0 0.0
    %963 = vmatpush1.xpose.msra.mxu0 0.0
    %964 = vmatprep.subr.mxu0 0.0
    %965 = vmatpush1.xpose.msra.mxu0 0.0
    %966 = vmatprep.mubr.f32.mxu0 %v254
    %967 = vmatmul.mubr.f32.gmra.mrb[0].mxu0 %v246
    %v968 = vpop.f32.mrb[0].mxu0
    %v969 = vadd.f32 %v899, %v968
    %v970 = vpop.f32.mrb[0].mxu0
    %971 = vdwg.mxu0
    %972 = vmatprep.subr.mxu0 %v70
    %973 = vmatpush1.xpose.msra.mxu0 %v69
    %974 = vmatprep.subr.mxu0 %v126
    %975 = vmatpush1.xpose.msra.mxu0 %v125
    %976 = vmatprep.subr.mxu0 0.0
    %977 = vmatpush1.xpose.msra.mxu0 0.0
    %978 = vmatprep.subr.mxu0 0.0
    %979 = vmatpush1.xpose.msra.mxu0 0.0
    %980 = vmatprep.subr.mxu0 0.0
    %981 = vmatpush1.xpose.msra.mxu0 0.0
    %982 = vmatprep.subr.mxu0 0.0
    %983 = vmatpush1.xpose.msra.mxu0 0.0
    %984 = vmatprep.subr.mxu0 0.0
    %985 = vmatpush1.xpose.msra.mxu0 0.0
    %986 = vmatprep.subr.mxu0 0.0
    %987 = vmatpush1.xpose.msra.mxu0 0.0
    %988 = vmatprep.subr.mxu0 0.0
    %989 = vmatpush1.xpose.msra.mxu0 0.0
    %990 = vmatprep.subr.mxu0 0.0
    %991 = vmatpush1.xpose.msra.mxu0 0.0
    %992 = vmatprep.subr.mxu0 0.0
    %993 = vmatpush1.xpose.msra.mxu0 0.0
    %994 = vmatprep.subr.mxu0 0.0
    %995 = vmatpush1.xpose.msra.mxu0 0.0
    %996 = vmatprep.subr.mxu0 0.0
    %997 = vmatpush1.xpose.msra.mxu0 0.0
    %998 = vmatprep.subr.mxu0 0.0
    %999 = vmatpush1.xpose.msra.mxu0 0.0
    %1000 = vmatprep.subr.mxu0 0.0
    %1001 = vmatpush1.xpose.msra.mxu0 0.0
    %1002 = vmatprep.subr.mxu0 0.0
    %1003 = vmatpush1.xpose.msra.mxu0 0.0
    %1004 = vmatprep.subr.mxu0 0.0
    %1005 = vmatpush1.xpose.msra.mxu0 0.0
    %1006 = vmatprep.subr.mxu0 0.0
    %1007 = vmatpush1.xpose.msra.mxu0 0.0
    %1008 = vmatprep.subr.mxu0 0.0
    %1009 = vmatpush1.xpose.msra.mxu0 0.0
    %1010 = vmatprep.subr.mxu0 0.0
    %1011 = vmatpush1.xpose.msra.mxu0 0.0
    %1012 = vmatprep.subr.mxu0 0.0
    %1013 = vmatpush1.xpose.msra.mxu0 0.0
    %1014 = vmatprep.subr.mxu0 0.0
    %1015 = vmatpush1.xpose.msra.mxu0 0.0
    %1016 = vmatprep.subr.mxu0 0.0
    %1017 = vmatpush1.xpose.msra.mxu0 0.0
    %1018 = vmatprep.subr.mxu0 0.0
    %1019 = vmatpush1.xpose.msra.mxu0 0.0
    %1020 = vmatprep.subr.mxu0 0.0
    %1021 = vmatpush1.xpose.msra.mxu0 0.0
    %1022 = vmatprep.subr.mxu0 0.0
    %1023 = vmatpush1.xpose.msra.mxu0 0.0
    %1024 = vmatprep.subr.mxu0 0.0
    %1025 = vmatpush1.xpose.msra.mxu0 0.0
    %1026 = vmatprep.subr.mxu0 0.0
    %1027 = vmatpush1.xpose.msra.mxu0 0.0
    %1028 = vmatprep.subr.mxu0 0.0
    %1029 = vmatpush1.xpose.msra.mxu0 0.0
    %1030 = vmatprep.subr.mxu0 0.0
    %1031 = vmatpush1.xpose.msra.mxu0 0.0
    %1032 = vmatprep.subr.mxu0 0.0
    %1033 = vmatpush1.xpose.msra.mxu0 0.0
    %1034 = vmatprep.subr.mxu0 0.0
    %1035 = vmatpush1.xpose.msra.mxu0 0.0
    %1036 = vmatprep.mubr.f32.mxu0 %v255
    %1037 = vmatmul.mubr.f32.gmra.mrb[0].mxu0 %v253
    %v1038 = vpop.f32.mrb[0].mxu0
    %v1039 = vadd.f32 %v969, %v1038
    %v1040 = vpop.f32.mrb[0].mxu0
    %1041 = vdwg.mxu0
    %1042 = vmatprep.subr.mxu0 %v72
    %1043 = vmatpush1.xpose.msra.mxu0 %v71
    %1044 = vmatprep.subr.mxu0 %v128
    %1045 = vmatpush1.xpose.msra.mxu0 %v127
    %1046 = vmatprep.subr.mxu0 0.0
    %1047 = vmatpush1.xpose.msra.mxu0 0.0
    %1048 = vmatprep.subr.mxu0 0.0
    %1049 = vmatpush1.xpose.msra.mxu0 0.0
    %1050 = vmatprep.subr.mxu0 0.0
    %1051 = vmatpush1.xpose.msra.mxu0 0.0
    %1052 = vmatprep.subr.mxu0 0.0
    %1053 = vmatpush1.xpose.msra.mxu0 0.0
    %1054 = vmatprep.subr.mxu0 0.0
    %1055 = vmatpush1.xpose.msra.mxu0 0.0
    %1056 = vmatprep.subr.mxu0 0.0
    %1057 = vmatpush1.xpose.msra.mxu0 0.0
    %1058 = vmatprep.subr.mxu0 0.0
    %1059 = vmatpush1.xpose.msra.mxu0 0.0
    %1060 = vmatprep.subr.mxu0 0.0
    %1061 = vmatpush1.xpose.msra.mxu0 0.0
    %1062 = vmatprep.subr.mxu0 0.0
    %1063 = vmatpush1.xpose.msra.mxu0 0.0
    %1064 = vmatprep.subr.mxu0 0.0
    %1065 = vmatpush1.xpose.msra.mxu0 0.0
    %1066 = vmatprep.subr.mxu0 0.0
    %1067 = vmatpush1.xpose.msra.mxu0 0.0
    %1068 = vmatprep.subr.mxu0 0.0
    %1069 = vmatpush1.xpose.msra.mxu0 0.0
    %1070 = vmatprep.subr.mxu0 0.0
    %1071 = vmatpush1.xpose.msra.mxu0 0.0
    %1072 = vmatprep.subr.mxu0 0.0
    %1073 = vmatpush1.xpose.msra.mxu0 0.0
    %1074 = vmatprep.subr.mxu0 0.0
    %1075 = vmatpush1.xpose.msra.mxu0 0.0
    %1076 = vmatprep.subr.mxu0 0.0
    %1077 = vmatpush1.xpose.msra.mxu0 0.0
    %1078 = vmatprep.subr.mxu0 0.0
    %1079 = vmatpush1.xpose.msra.mxu0 0.0
    %1080 = vmatprep.subr.mxu0 0.0
    %1081 = vmatpush1.xpose.msra.mxu0 0.0
    %1082 = vmatprep.subr.mxu0 0.0
    %1083 = vmatpush1.xpose.msra.mxu0 0.0
    %1084 = vmatprep.subr.mxu0 0.0
    %1085 = vmatpush1.xpose.msra.mxu0 0.0
    %1086 = vmatprep.subr.mxu0 0.0
    %1087 = vmatpush1.xpose.msra.mxu0 0.0
    %1088 = vmatprep.subr.mxu0 0.0
    %1089 = vmatpush1.xpose.msra.mxu0 0.0
    %1090 = vmatprep.subr.mxu0 0.0
    %1091 = vmatpush1.xpose.msra.mxu0 0.0
    %1092 = vmatprep.subr.mxu0 0.0
    %1093 = vmatpush1.xpose.msra.mxu0 0.0
    %1094 = vmatprep.subr.mxu0 0.0
    %1095 = vmatpush1.xpose.msra.mxu0 0.0
    %1096 = vmatprep.subr.mxu0 0.0
    %1097 = vmatpush1.xpose.msra.mxu0 0.0
    %1098 = vmatprep.subr.mxu0 0.0
    %1099 = vmatpush1.xpose.msra.mxu0 0.0
    %1100 = vmatprep.subr.mxu0 0.0
    %1101 = vmatpush1.xpose.msra.mxu0 0.0
    %1102 = vmatprep.subr.mxu0 0.0
    %1103 = vmatpush1.xpose.msra.mxu0 0.0
    %1104 = vmatprep.subr.mxu0 0.0
    %1105 = vmatpush1.xpose.msra.mxu0 0.0
    %1106 = vmatprep.mubr.f32.mxu0 %v271
    %1107 = vmatmul.mubr.f32.gmra.mrb[0].mxu0 %v263
    %v1108 = vpop.f32.mrb[0].mxu0
    %v1109 = vadd.f32 %v1039, %v1108
    %v1110 = vpop.f32.mrb[0].mxu0
    %1111 = vdwg.mxu0
    %1112 = vmatprep.subr.mxu0 %v74
    %1113 = vmatpush1.xpose.msra.mxu0 %v73
    %1114 = vmatprep.subr.mxu0 %v130
    %1115 = vmatpush1.xpose.msra.mxu0 %v129
    %1116 = vmatprep.subr.mxu0 0.0
    %1117 = vmatpush1.xpose.msra.mxu0 0.0
    %1118 = vmatprep.subr.mxu0 0.0
    %1119 = vmatpush1.xpose.msra.mxu0 0.0
    %1120 = vmatprep.subr.mxu0 0.0
    %1121 = vmatpush1.xpose.msra.mxu0 0.0
    %1122 = vmatprep.subr.mxu0 0.0
    %1123 = vmatpush1.xpose.msra.mxu0 0.0
    %1124 = vmatprep.subr.mxu0 0.0
    %1125 = vmatpush1.xpose.msra.mxu0 0.0
    %1126 = vmatprep.subr.mxu0 0.0
    %1127 = vmatpush1.xpose.msra.mxu0 0.0
    %1128 = vmatprep.subr.mxu0 0.0
    %1129 = vmatpush1.xpose.msra.mxu0 0.0
    %1130 = vmatprep.subr.mxu0 0.0
    %1131 = vmatpush1.xpose.msra.mxu0 0.0
    %1132 = vmatprep.subr.mxu0 0.0
    %1133 = vmatpush1.xpose.msra.mxu0 0.0
    %1134 = vmatprep.subr.mxu0 0.0
    %1135 = vmatpush1.xpose.msra.mxu0 0.0
    %1136 = vmatprep.subr.mxu0 0.0
    %1137 = vmatpush1.xpose.msra.mxu0 0.0
    %1138 = vmatprep.subr.mxu0 0.0
    %1139 = vmatpush1.xpose.msra.mxu0 0.0
    %1140 = vmatprep.subr.mxu0 0.0
    %1141 = vmatpush1.xpose.msra.mxu0 0.0
    %1142 = vmatprep.subr.mxu0 0.0
    %1143 = vmatpush1.xpose.msra.mxu0 0.0
    %1144 = vmatprep.subr.mxu0 0.0
    %1145 = vmatpush1.xpose.msra.mxu0 0.0
    %1146 = vmatprep.subr.mxu0 0.0
    %1147 = vmatpush1.xpose.msra.mxu0 0.0
    %1148 = vmatprep.subr.mxu0 0.0
    %1149 = vmatpush1.xpose.msra.mxu0 0.0
    %1150 = vmatprep.subr.mxu0 0.0
    %1151 = vmatpush1.xpose.msra.mxu0 0.0
    %1152 = vmatprep.subr.mxu0 0.0
    %1153 = vmatpush1.xpose.msra.mxu0 0.0
    %1154 = vmatprep.subr.mxu0 0.0
    %1155 = vmatpush1.xpose.msra.mxu0 0.0
    %1156 = vmatprep.subr.mxu0 0.0
    %1157 = vmatpush1.xpose.msra.mxu0 0.0
    %1158 = vmatprep.subr.mxu0 0.0
    %1159 = vmatpush1.xpose.msra.mxu0 0.0
    %1160 = vmatprep.subr.mxu0 0.0
    %1161 = vmatpush1.xpose.msra.mxu0 0.0
    %1162 = vmatprep.subr.mxu0 0.0
    %1163 = vmatpush1.xpose.msra.mxu0 0.0
    %1164 = vmatprep.subr.mxu0 0.0
    %1165 = vmatpush1.xpose.msra.mxu0 0.0
    %1166 = vmatprep.subr.mxu0 0.0
    %1167 = vmatpush1.xpose.msra.mxu0 0.0
    %1168 = vmatprep.subr.mxu0 0.0
    %1169 = vmatpush1.xpose.msra.mxu0 0.0
    %1170 = vmatprep.subr.mxu0 0.0
    %1171 = vmatpush1.xpose.msra.mxu0 0.0
    %1172 = vmatprep.subr.mxu0 0.0
    %1173 = vmatpush1.xpose.msra.mxu0 0.0
    %1174 = vmatprep.subr.mxu0 0.0
    %1175 = vmatpush1.xpose.msra.mxu0 0.0
    %1176 = vmatprep.mubr.f32.mxu0 %v272
    %1177 = vmatmul.mubr.f32.gmra.mrb[0].mxu0 %v270
    %v1178 = vpop.f32.mrb[0].mxu0
    %v1179 = vadd.f32 %v1109, %v1178
    %v1180 = vpop.f32.mrb[0].mxu0
    %1181 = vdwg.mxu0
    %1182 = vmatprep.subr.mxu0 %v76
    %1183 = vmatpush1.xpose.msra.mxu0 %v75
    %1184 = vmatprep.subr.mxu0 %v132
    %1185 = vmatpush1.xpose.msra.mxu0 %v131
    %1186 = vmatprep.subr.mxu0 0.0
    %1187 = vmatpush1.xpose.msra.mxu0 0.0
    %1188 = vmatprep.subr.mxu0 0.0
    %1189 = vmatpush1.xpose.msra.mxu0 0.0
    %1190 = vmatprep.subr.mxu0 0.0
    %1191 = vmatpush1.xpose.msra.mxu0 0.0
    %1192 = vmatprep.subr.mxu0 0.0
    %1193 = vmatpush1.xpose.msra.mxu0 0.0
    %1194 = vmatprep.subr.mxu0 0.0
    %1195 = vmatpush1.xpose.msra.mxu0 0.0
    %1196 = vmatprep.subr.mxu0 0.0
    %1197 = vmatpush1.xpose.msra.mxu0 0.0
    %1198 = vmatprep.subr.mxu0 0.0
    %1199 = vmatpush1.xpose.msra.mxu0 0.0
    %1200 = vmatprep.subr.mxu0 0.0
    %1201 = vmatpush1.xpose.msra.mxu0 0.0
    %1202 = vmatprep.subr.mxu0 0.0
    %1203 = vmatpush1.xpose.msra.mxu0 0.0
    %1204 = vmatprep.subr.mxu0 0.0
    %1205 = vmatpush1.xpose.msra.mxu0 0.0
    %1206 = vmatprep.subr.mxu0 0.0
    %1207 = vmatpush1.xpose.msra.mxu0 0.0
    %1208 = vmatprep.subr.mxu0 0.0
    %1209 = vmatpush1.xpose.msra.mxu0 0.0
    %1210 = vmatprep.subr.mxu0 0.0
    %1211 = vmatpush1.xpose.msra.mxu0 0.0
    %1212 = vmatprep.subr.mxu0 0.0
    %1213 = vmatpush1.xpose.msra.mxu0 0.0
    %1214 = vmatprep.subr.mxu0 0.0
    %1215 = vmatpush1.xpose.msra.mxu0 0.0
    %1216 = vmatprep.subr.mxu0 0.0
    %1217 = vmatpush1.xpose.msra.mxu0 0.0
    %1218 = vmatprep.subr.mxu0 0.0
    %1219 = vmatpush1.xpose.msra.mxu0 0.0
    %1220 = vmatprep.subr.mxu0 0.0
    %1221 = vmatpush1.xpose.msra.mxu0 0.0
    %1222 = vmatprep.subr.mxu0 0.0
    %1223 = vmatpush1.xpose.msra.mxu0 0.0
    %1224 = vmatprep.subr.mxu0 0.0
    %1225 = vmatpush1.xpose.msra.mxu0 0.0
    %1226 = vmatprep.subr.mxu0 0.0
    %1227 = vmatpush1.xpose.msra.mxu0 0.0
    %1228 = vmatprep.subr.mxu0 0.0
    %1229 = vmatpush1.xpose.msra.mxu0 0.0
    %1230 = vmatprep.subr.mxu0 0.0
    %1231 = vmatpush1.xpose.msra.mxu0 0.0
    %1232 = vmatprep.subr.mxu0 0.0
    %1233 = vmatpush1.xpose.msra.mxu0 0.0
    %1234 = vmatprep.subr.mxu0 0.0
    %1235 = vmatpush1.xpose.msra.mxu0 0.0
    %1236 = vmatprep.subr.mxu0 0.0
    %1237 = vmatpush1.xpose.msra.mxu0 0.0
    %1238 = vmatprep.subr.mxu0 0.0
    %1239 = vmatpush1.xpose.msra.mxu0 0.0
    %1240 = vmatprep.subr.mxu0 0.0
    %1241 = vmatpush1.xpose.msra.mxu0 0.0
    %1242 = vmatprep.subr.mxu0 0.0
    %1243 = vmatpush1.xpose.msra.mxu0 0.0
    %1244 = vmatprep.subr.mxu0 0.0
    %1245 = vmatpush1.xpose.msra.mxu0 0.0
    %1246 = vmatprep.mubr.f32.mxu0 %v288
    %1247 = vmatmul.mubr.f32.gmra.mrb[0].mxu0 %v280
    %v1248 = vpop.f32.mrb[0].mxu0
    %v1249 = vadd.f32 %v1179, %v1248
    %v1250 = vpop.f32.mrb[0].mxu0
    %1251 = vdwg.mxu0
    %1252 = vmatprep.subr.mxu0 %v78
    %1253 = vmatpush1.xpose.msra.mxu0 %v77
    %1254 = vmatprep.subr.mxu0 %v134
    %1255 = vmatpush1.xpose.msra.mxu0 %v133
    %1256 = vmatprep.subr.mxu0 0.0
    %1257 = vmatpush1.xpose.msra.mxu0 0.0
    %1258 = vmatprep.subr.mxu0 0.0
    %1259 = vmatpush1.xpose.msra.mxu0 0.0
    %1260 = vmatprep.subr.mxu0 0.0
    %1261 = vmatpush1.xpose.msra.mxu0 0.0
    %1262 = vmatprep.subr.mxu0 0.0
    %1263 = vmatpush1.xpose.msra.mxu0 0.0
    %1264 = vmatprep.subr.mxu0 0.0
    %1265 = vmatpush1.xpose.msra.mxu0 0.0
    %1266 = vmatprep.subr.mxu0 0.0
    %1267 = vmatpush1.xpose.msra.mxu0 0.0
    %1268 = vmatprep.subr.mxu0 0.0
    %1269 = vmatpush1.xpose.msra.mxu0 0.0
    %1270 = vmatprep.subr.mxu0 0.0
    %1271 = vmatpush1.xpose.msra.mxu0 0.0
    %1272 = vmatprep.subr.mxu0 0.0
    %1273 = vmatpush1.xpose.msra.mxu0 0.0
    %1274 = vmatprep.subr.mxu0 0.0
    %1275 = vmatpush1.xpose.msra.mxu0 0.0
    %1276 = vmatprep.subr.mxu0 0.0
    %1277 = vmatpush1.xpose.msra.mxu0 0.0
    %1278 = vmatprep.subr.mxu0 0.0
    %1279 = vmatpush1.xpose.msra.mxu0 0.0
    %1280 = vmatprep.subr.mxu0 0.0
    %1281 = vmatpush1.xpose.msra.mxu0 0.0
    %1282 = vmatprep.subr.mxu0 0.0
    %1283 = vmatpush1.xpose.msra.mxu0 0.0
    %1284 = vmatprep.subr.mxu0 0.0
    %1285 = vmatpush1.xpose.msra.mxu0 0.0
    %1286 = vmatprep.subr.mxu0 0.0
    %1287 = vmatpush1.xpose.msra.mxu0 0.0
    %1288 = vmatprep.subr.mxu0 0.0
    %1289 = vmatpush1.xpose.msra.mxu0 0.0
    %1290 = vmatprep.subr.mxu0 0.0
    %1291 = vmatpush1.xpose.msra.mxu0 0.0
    %1292 = vmatprep.subr.mxu0 0.0
    %1293 = vmatpush1.xpose.msra.mxu0 0.0
    %1294 = vmatprep.subr.mxu0 0.0
    %1295 = vmatpush1.xpose.msra.mxu0 0.0
    %1296 = vmatprep.subr.mxu0 0.0
    %1297 = vmatpush1.xpose.msra.mxu0 0.0
    %1298 = vmatprep.subr.mxu0 0.0
    %1299 = vmatpush1.xpose.msra.mxu0 0.0
    %1300 = vmatprep.subr.mxu0 0.0
    %1301 = vmatpush1.xpose.msra.mxu0 0.0
    %1302 = vmatprep.subr.mxu0 0.0
    %1303 = vmatpush1.xpose.msra.mxu0 0.0
    %1304 = vmatprep.subr.mxu0 0.0
    %1305 = vmatpush1.xpose.msra.mxu0 0.0
    %1306 = vmatprep.subr.mxu0 0.0
    %1307 = vmatpush1.xpose.msra.mxu0 0.0
    %1308 = vmatprep.subr.mxu0 0.0
    %1309 = vmatpush1.xpose.msra.mxu0 0.0
    %1310 = vmatprep.subr.mxu0 0.0
    %1311 = vmatpush1.xpose.msra.mxu0 0.0
    %1312 = vmatprep.subr.mxu0 0.0
    %1313 = vmatpush1.xpose.msra.mxu0 0.0
    %1314 = vmatprep.subr.mxu0 0.0
    %1315 = vmatpush1.xpose.msra.mxu0 0.0
    %1316 = vmatprep.mubr.f32.mxu0 %v289
    %1317 = vmatmul.mubr.f32.gmra.mrb[0].mxu0 %v287
    %v1318 = vpop.f32.mrb[0].mxu0
    %v1319 = vadd.f32 %v1249, %v1318
    %v1320 = vpop.f32.mrb[0].mxu0
    %1321 = vdwg.mxu0
    %1322 = vmatprep.subr.mxu0 %v80
    %1323 = vmatpush1.xpose.msra.mxu0 %v79
    %1324 = vmatprep.subr.mxu0 %v136
    %1325 = vmatpush1.xpose.msra.mxu0 %v135
    %1326 = vmatprep.subr.mxu0 0.0
    %1327 = vmatpush1.xpose.msra.mxu0 0.0
    %1328 = vmatprep.subr.mxu0 0.0
    %1329 = vmatpush1.xpose.msra.mxu0 0.0
    %1330 = vmatprep.subr.mxu0 0.0
    %1331 = vmatpush1.xpose.msra.mxu0 0.0
    %1332 = vmatprep.subr.mxu0 0.0
    %1333 = vmatpush1.xpose.msra.mxu0 0.0
    %1334 = vmatprep.subr.mxu0 0.0
    %1335 = vmatpush1.xpose.msra.mxu0 0.0
    %1336 = vmatprep.subr.mxu0 0.0
    %1337 = vmatpush1.xpose.msra.mxu0 0.0
    %1338 = vmatprep.subr.mxu0 0.0
    %1339 = vmatpush1.xpose.msra.mxu0 0.0
    %1340 = vmatprep.subr.mxu0 0.0
    %1341 = vmatpush1.xpose.msra.mxu0 0.0
    %1342 = vmatprep.subr.mxu0 0.0
    %1343 = vmatpush1.xpose.msra.mxu0 0.0
    %1344 = vmatprep.subr.mxu0 0.0
    %1345 = vmatpush1.xpose.msra.mxu0 0.0
    %1346 = vmatprep.subr.mxu0 0.0
    %1347 = vmatpush1.xpose.msra.mxu0 0.0
    %1348 = vmatprep.subr.mxu0 0.0
    %1349 = vmatpush1.xpose.msra.mxu0 0.0
    %1350 = vmatprep.subr.mxu0 0.0
    %1351 = vmatpush1.xpose.msra.mxu0 0.0
    %1352 = vmatprep.subr.mxu0 0.0
    %1353 = vmatpush1.xpose.msra.mxu0 0.0
    %1354 = vmatprep.subr.mxu0 0.0
    %1355 = vmatpush1.xpose.msra.mxu0 0.0
    %1356 = vmatprep.subr.mxu0 0.0
    %1357 = vmatpush1.xpose.msra.mxu0 0.0
    %1358 = vmatprep.subr.mxu0 0.0
    %1359 = vmatpush1.xpose.msra.mxu0 0.0
    %1360 = vmatprep.subr.mxu0 0.0
    %1361 = vmatpush1.xpose.msra.mxu0 0.0
    %1362 = vmatprep.subr.mxu0 0.0
    %1363 = vmatpush1.xpose.msra.mxu0 0.0
    %1364 = vmatprep.subr.mxu0 0.0
    %1365 = vmatpush1.xpose.msra.mxu0 0.0
    %1366 = vmatprep.subr.mxu0 0.0
    %1367 = vmatpush1.xpose.msra.mxu0 0.0
    %1368 = vmatprep.subr.mxu0 0.0
    %1369 = vmatpush1.xpose.msra.mxu0 0.0
    %1370 = vmatprep.subr.mxu0 0.0
    %1371 = vmatpush1.xpose.msra.mxu0 0.0
    %1372 = vmatprep.subr.mxu0 0.0
    %1373 = vmatpush1.xpose.msra.mxu0 0.0
    %1374 = vmatprep.subr.mxu0 0.0
    %1375 = vmatpush1.xpose.msra.mxu0 0.0
    %1376 = vmatprep.subr.mxu0 0.0
    %1377 = vmatpush1.xpose.msra.mxu0 0.0
    %1378 = vmatprep.subr.mxu0 0.0
    %1379 = vmatpush1.xpose.msra.mxu0 0.0
    %1380 = vmatprep.subr.mxu0 0.0
    %1381 = vmatpush1.xpose.msra.mxu0 0.0
    %1382 = vmatprep.subr.mxu0 0.0
    %1383 = vmatpush1.xpose.msra.mxu0 0.0
    %1384 = vmatprep.subr.mxu0 0.0
    %1385 = vmatpush1.xpose.msra.mxu0 0.0
    %1386 = vmatprep.mubr.f32.mxu0 %v305
    %1387 = vmatmul.mubr.f32.gmra.mrb[0].mxu0 %v297
    %v1388 = vpop.f32.mrb[0].mxu0
    %v1389 = vadd.f32 %v1319, %v1388
    %v1390 = vpop.f32.mrb[0].mxu0
    %1391 = vdwg.mxu0
    %1392 = vmatprep.subr.mxu0 %v82
    %1393 = vmatpush1.xpose.msra.mxu0 %v81
    %1394 = vmatprep.subr.mxu0 %v138
    %1395 = vmatpush1.xpose.msra.mxu0 %v137
    %1396 = vmatprep.subr.mxu0 0.0
    %1397 = vmatpush1.xpose.msra.mxu0 0.0
    %1398 = vmatprep.subr.mxu0 0.0
    %1399 = vmatpush1.xpose.msra.mxu0 0.0
    %1400 = vmatprep.subr.mxu0 0.0
    %1401 = vmatpush1.xpose.msra.mxu0 0.0
    %1402 = vmatprep.subr.mxu0 0.0
    %1403 = vmatpush1.xpose.msra.mxu0 0.0
    %1404 = vmatprep.subr.mxu0 0.0
    %1405 = vmatpush1.xpose.msra.mxu0 0.0
    %1406 = vmatprep.subr.mxu0 0.0
    %1407 = vmatpush1.xpose.msra.mxu0 0.0
    %1408 = vmatprep.subr.mxu0 0.0
    %1409 = vmatpush1.xpose.msra.mxu0 0.0
    %1410 = vmatprep.subr.mxu0 0.0
    %1411 = vmatpush1.xpose.msra.mxu0 0.0
    %1412 = vmatprep.subr.mxu0 0.0
    %1413 = vmatpush1.xpose.msra.mxu0 0.0
    %1414 = vmatprep.subr.mxu0 0.0
    %1415 = vmatpush1.xpose.msra.mxu0 0.0
    %1416 = vmatprep.subr.mxu0 0.0
    %1417 = vmatpush1.xpose.msra.mxu0 0.0
    %1418 = vmatprep.subr.mxu0 0.0
    %1419 = vmatpush1.xpose.msra.mxu0 0.0
    %1420 = vmatprep.subr.mxu0 0.0
    %1421 = vmatpush1.xpose.msra.mxu0 0.0
    %1422 = vmatprep.subr.mxu0 0.0
    %1423 = vmatpush1.xpose.msra.mxu0 0.0
    %1424 = vmatprep.subr.mxu0 0.0
    %1425 = vmatpush1.xpose.msra.mxu0 0.0
    %1426 = vmatprep.subr.mxu0 0.0
    %1427 = vmatpush1.xpose.msra.mxu0 0.0
    %1428 = vmatprep.subr.mxu0 0.0
    %1429 = vmatpush1.xpose.msra.mxu0 0.0
    %1430 = vmatprep.subr.mxu0 0.0
    %1431 = vmatpush1.xpose.msra.mxu0 0.0
    %1432 = vmatprep.subr.mxu0 0.0
    %1433 = vmatpush1.xpose.msra.mxu0 0.0
    %1434 = vmatprep.subr.mxu0 0.0
    %1435 = vmatpush1.xpose.msra.mxu0 0.0
    %1436 = vmatprep.subr.mxu0 0.0
    %1437 = vmatpush1.xpose.msra.mxu0 0.0
    %1438 = vmatprep.subr.mxu0 0.0
    %1439 = vmatpush1.xpose.msra.mxu0 0.0
    %1440 = vmatprep.subr.mxu0 0.0
    %1441 = vmatpush1.xpose.msra.mxu0 0.0
    %1442 = vmatprep.subr.mxu0 0.0
    %1443 = vmatpush1.xpose.msra.mxu0 0.0
    %1444 = vmatprep.subr.mxu0 0.0
    %1445 = vmatpush1.xpose.msra.mxu0 0.0
    %1446 = vmatprep.subr.mxu0 0.0
    %1447 = vmatpush1.xpose.msra.mxu0 0.0
    %1448 = vmatprep.subr.mxu0 0.0
    %1449 = vmatpush1.xpose.msra.mxu0 0.0
    %1450 = vmatprep.subr.mxu0 0.0
    %1451 = vmatpush1.xpose.msra.mxu0 0.0
    %1452 = vmatprep.subr.mxu0 0.0
    %1453 = vmatpush1.xpose.msra.mxu0 0.0
    %1454 = vmatprep.subr.mxu0 0.0
    %1455 = vmatpush1.xpose.msra.mxu0 0.0
    %1456 = vmatprep.mubr.f32.mxu0 %v306
    %1457 = vmatmul.mubr.f32.gmra.mrb[0].mxu0 %v304
    %v1458 = vpop.f32.mrb[0].mxu0
    %v1459 = vadd.f32 %v1389, %v1458
    %v1460 = vpop.f32.mrb[0].mxu0
    %1461 = vdwg.mxu0
    %1462 = vmatprep.subr.mxu0 %v84
    %1463 = vmatpush1.xpose.msra.mxu0 %v83
    %1464 = vmatprep.subr.mxu0 %v140
    %1465 = vmatpush1.xpose.msra.mxu0 %v139
    %1466 = vmatprep.subr.mxu0 0.0
    %1467 = vmatpush1.xpose.msra.mxu0 0.0
    %1468 = vmatprep.subr.mxu0 0.0
    %1469 = vmatpush1.xpose.msra.mxu0 0.0
    %1470 = vmatprep.subr.mxu0 0.0
    %1471 = vmatpush1.xpose.msra.mxu0 0.0
    %1472 = vmatprep.subr.mxu0 0.0
    %1473 = vmatpush1.xpose.msra.mxu0 0.0
    %1474 = vmatprep.subr.mxu0 0.0
    %1475 = vmatpush1.xpose.msra.mxu0 0.0
    %1476 = vmatprep.subr.mxu0 0.0
    %1477 = vmatpush1.xpose.msra.mxu0 0.0
    %1478 = vmatprep.subr.mxu0 0.0
    %1479 = vmatpush1.xpose.msra.mxu0 0.0
    %1480 = vmatprep.subr.mxu0 0.0
    %1481 = vmatpush1.xpose.msra.mxu0 0.0
    %1482 = vmatprep.subr.mxu0 0.0
    %1483 = vmatpush1.xpose.msra.mxu0 0.0
    %1484 = vmatprep.subr.mxu0 0.0
    %1485 = vmatpush1.xpose.msra.mxu0 0.0
    %1486 = vmatprep.subr.mxu0 0.0
    %1487 = vmatpush1.xpose.msra.mxu0 0.0
    %1488 = vmatprep.subr.mxu0 0.0
    %1489 = vmatpush1.xpose.msra.mxu0 0.0
    %1490 = vmatprep.subr.mxu0 0.0
    %1491 = vmatpush1.xpose.msra.mxu0 0.0
    %1492 = vmatprep.subr.mxu0 0.0
    %1493 = vmatpush1.xpose.msra.mxu0 0.0
    %1494 = vmatprep.subr.mxu0 0.0
    %1495 = vmatpush1.xpose.msra.mxu0 0.0
    %1496 = vmatprep.subr.mxu0 0.0
    %1497 = vmatpush1.xpose.msra.mxu0 0.0
    %1498 = vmatprep.subr.mxu0 0.0
    %1499 = vmatpush1.xpose.msra.mxu0 0.0
    %1500 = vmatprep.subr.mxu0 0.0
    %1501 = vmatpush1.xpose.msra.mxu0 0.0
    %1502 = vmatprep.subr.mxu0 0.0
    %1503 = vmatpush1.xpose.msra.mxu0 0.0
    %1504 = vmatprep.subr.mxu0 0.0
    %1505 = vmatpush1.xpose.msra.mxu0 0.0
    %1506 = vmatprep.subr.mxu0 0.0
    %1507 = vmatpush1.xpose.msra.mxu0 0.0
    %1508 = vmatprep.subr.mxu0 0.0
    %1509 = vmatpush1.xpose.msra.mxu0 0.0
    %1510 = vmatprep.subr.mxu0 0.0
    %1511 = vmatpush1.xpose.msra.mxu0 0.0
    %1512 = vmatprep.subr.mxu0 0.0
    %1513 = vmatpush1.xpose.msra.mxu0 0.0
    %1514 = vmatprep.subr.mxu0 0.0
    %1515 = vmatpush1.xpose.msra.mxu0 0.0
    %1516 = vmatprep.subr.mxu0 0.0
    %1517 = vmatpush1.xpose.msra.mxu0 0.0
    %1518 = vmatprep.subr.mxu0 0.0
    %1519 = vmatpush1.xpose.msra.mxu0 0.0
    %1520 = vmatprep.subr.mxu0 0.0
    %1521 = vmatpush1.xpose.msra.mxu0 0.0
    %1522 = vmatprep.subr.mxu0 0.0
    %1523 = vmatpush1.xpose.msra.mxu0 0.0
    %1524 = vmatprep.subr.mxu0 0.0
    %1525 = vmatpush1.xpose.msra.mxu0 0.0
    %1526 = vmatprep.mubr.f32.mxu0 %v322
    %1527 = vmatmul.mubr.f32.gmra.mrb[0].mxu0 %v314
    %v1528 = vpop.f32.mrb[0].mxu0
    %v1529 = vadd.f32 %v1459, %v1528
    %v1530 = vpop.f32.mrb[0].mxu0
    %1531 = vdwg.mxu0
    %1532 = vmatprep.subr.mxu0 %v86
    %1533 = vmatpush1.xpose.msra.mxu0 %v85
    %1534 = vmatprep.subr.mxu0 %v142
    %1535 = vmatpush1.xpose.msra.mxu0 %v141
    %1536 = vmatprep.subr.mxu0 0.0
    %1537 = vmatpush1.xpose.msra.mxu0 0.0
    %1538 = vmatprep.subr.mxu0 0.0
    %1539 = vmatpush1.xpose.msra.mxu0 0.0
    %1540 = vmatprep.subr.mxu0 0.0
    %1541 = vmatpush1.xpose.msra.mxu0 0.0
    %1542 = vmatprep.subr.mxu0 0.0
    %1543 = vmatpush1.xpose.msra.mxu0 0.0
    %1544 = vmatprep.subr.mxu0 0.0
    %1545 = vmatpush1.xpose.msra.mxu0 0.0
    %1546 = vmatprep.subr.mxu0 0.0
    %1547 = vmatpush1.xpose.msra.mxu0 0.0
    %1548 = vmatprep.subr.mxu0 0.0
    %1549 = vmatpush1.xpose.msra.mxu0 0.0
    %1550 = vmatprep.subr.mxu0 0.0
    %1551 = vmatpush1.xpose.msra.mxu0 0.0
    %1552 = vmatprep.subr.mxu0 0.0
    %1553 = vmatpush1.xpose.msra.mxu0 0.0
    %1554 = vmatprep.subr.mxu0 0.0
    %1555 = vmatpush1.xpose.msra.mxu0 0.0
    %1556 = vmatprep.subr.mxu0 0.0
    %1557 = vmatpush1.xpose.msra.mxu0 0.0
    %1558 = vmatprep.subr.mxu0 0.0
    %1559 = vmatpush1.xpose.msra.mxu0 0.0
    %1560 = vmatprep.subr.mxu0 0.0
    %1561 = vmatpush1.xpose.msra.mxu0 0.0
    %1562 = vmatprep.subr.mxu0 0.0
    %1563 = vmatpush1.xpose.msra.mxu0 0.0
    %1564 = vmatprep.subr.mxu0 0.0
    %1565 = vmatpush1.xpose.msra.mxu0 0.0
    %1566 = vmatprep.subr.mxu0 0.0
    %1567 = vmatpush1.xpose.msra.mxu0 0.0
    %1568 = vmatprep.subr.mxu0 0.0
    %1569 = vmatpush1.xpose.msra.mxu0 0.0
    %1570 = vmatprep.subr.mxu0 0.0
    %1571 = vmatpush1.xpose.msra.mxu0 0.0
    %1572 = vmatprep.subr.mxu0 0.0
    %1573 = vmatpush1.xpose.msra.mxu0 0.0
    %1574 = vmatprep.subr.mxu0 0.0
    %1575 = vmatpush1.xpose.msra.mxu0 0.0
    %1576 = vmatprep.subr.mxu0 0.0
    %1577 = vmatpush1.xpose.msra.mxu0 0.0
    %1578 = vmatprep.subr.mxu0 0.0
    %1579 = vmatpush1.xpose.msra.mxu0 0.0
    %1580 = vmatprep.subr.mxu0 0.0
    %1581 = vmatpush1.xpose.msra.mxu0 0.0
    %1582 = vmatprep.subr.mxu0 0.0
    %1583 = vmatpush1.xpose.msra.mxu0 0.0
    %1584 = vmatprep.subr.mxu0 0.0
    %1585 = vmatpush1.xpose.msra.mxu0 0.0
    %1586 = vmatprep.subr.mxu0 0.0
    %1587 = vmatpush1.xpose.msra.mxu0 0.0
    %1588 = vmatprep.subr.mxu0 0.0
    %1589 = vmatpush1.xpose.msra.mxu0 0.0
    %1590 = vmatprep.subr.mxu0 0.0
    %1591 = vmatpush1.xpose.msra.mxu0 0.0
    %1592 = vmatprep.subr.mxu0 0.0
    %1593 = vmatpush1.xpose.msra.mxu0 0.0
    %1594 = vmatprep.subr.mxu0 0.0
    %1595 = vmatpush1.xpose.msra.mxu0 0.0
    %1596 = vmatprep.mubr.f32.mxu0 %v323
    %1597 = vmatmul.mubr.f32.gmra.mrb[0].mxu0 %v321
    %v1598 = vpop.f32.mrb[0].mxu0
    %v1599 = vadd.f32 %v1529, %v1598
    %v1600 = vpop.f32.mrb[0].mxu0
    %1601 = vdwg.mxu0
    %1602 = vmatprep.subr.mxu0 %v88
    %1603 = vmatpush1.xpose.msra.mxu0 %v87
    %1604 = vmatprep.subr.mxu0 %v144
    %1605 = vmatpush1.xpose.msra.mxu0 %v143
    %1606 = vmatprep.subr.mxu0 0.0
    %1607 = vmatpush1.xpose.msra.mxu0 0.0
    %1608 = vmatprep.subr.mxu0 0.0
    %1609 = vmatpush1.xpose.msra.mxu0 0.0
    %1610 = vmatprep.subr.mxu0 0.0
    %1611 = vmatpush1.xpose.msra.mxu0 0.0
    %1612 = vmatprep.subr.mxu0 0.0
    %1613 = vmatpush1.xpose.msra.mxu0 0.0
    %1614 = vmatprep.subr.mxu0 0.0
    %1615 = vmatpush1.xpose.msra.mxu0 0.0
    %1616 = vmatprep.subr.mxu0 0.0
    %1617 = vmatpush1.xpose.msra.mxu0 0.0
    %1618 = vmatprep.subr.mxu0 0.0
    %1619 = vmatpush1.xpose.msra.mxu0 0.0
    %1620 = vmatprep.subr.mxu0 0.0
    %1621 = vmatpush1.xpose.msra.mxu0 0.0
    %1622 = vmatprep.subr.mxu0 0.0
    %1623 = vmatpush1.xpose.msra.mxu0 0.0
    %1624 = vmatprep.subr.mxu0 0.0
    %1625 = vmatpush1.xpose.msra.mxu0 0.0
    %1626 = vmatprep.subr.mxu0 0.0
    %1627 = vmatpush1.xpose.msra.mxu0 0.0
    %1628 = vmatprep.subr.mxu0 0.0
    %1629 = vmatpush1.xpose.msra.mxu0 0.0
    %1630 = vmatprep.subr.mxu0 0.0
    %1631 = vmatpush1.xpose.msra.mxu0 0.0
    %1632 = vmatprep.subr.mxu0 0.0
    %1633 = vmatpush1.xpose.msra.mxu0 0.0
    %1634 = vmatprep.subr.mxu0 0.0
    %1635 = vmatpush1.xpose.msra.mxu0 0.0
    %1636 = vmatprep.subr.mxu0 0.0
    %1637 = vmatpush1.xpose.msra.mxu0 0.0
    %1638 = vmatprep.subr.mxu0 0.0
    %1639 = vmatpush1.xpose.msra.mxu0 0.0
    %1640 = vmatprep.subr.mxu0 0.0
    %1641 = vmatpush1.xpose.msra.mxu0 0.0
    %1642 = vmatprep.subr.mxu0 0.0
    %1643 = vmatpush1.xpose.msra.mxu0 0.0
    %1644 = vmatprep.subr.mxu0 0.0
    %1645 = vmatpush1.xpose.msra.mxu0 0.0
    %1646 = vmatprep.subr.mxu0 0.0
    %1647 = vmatpush1.xpose.msra.mxu0 0.0
    %1648 = vmatprep.subr.mxu0 0.0
    %1649 = vmatpush1.xpose.msra.mxu0 0.0
    %1650 = vmatprep.subr.mxu0 0.0
    %1651 = vmatpush1.xpose.msra.mxu0 0.0
    %1652 = vmatprep.subr.mxu0 0.0
    %1653 = vmatpush1.xpose.msra.mxu0 0.0
    %1654 = vmatprep.subr.mxu0 0.0
    %1655 = vmatpush1.xpose.msra.mxu0 0.0
    %1656 = vmatprep.subr.mxu0 0.0
    %1657 = vmatpush1.xpose.msra.mxu0 0.0
    %1658 = vmatprep.subr.mxu0 0.0
    %1659 = vmatpush1.xpose.msra.mxu0 0.0
    %1660 = vmatprep.subr.mxu0 0.0
    %1661 = vmatpush1.xpose.msra.mxu0 0.0
    %1662 = vmatprep.subr.mxu0 0.0
    %1663 = vmatpush1.xpose.msra.mxu0 0.0
    %1664 = vmatprep.subr.mxu0 0.0
    %1665 = vmatpush1.xpose.msra.mxu0 0.0
    %1666 = vmatprep.mubr.f32.mxu0 %v339
    %1667 = vmatmul.mubr.f32.gmra.mrb[0].mxu0 %v331
    %v1668 = vpop.f32.mrb[0].mxu0
    %v1669 = vadd.f32 %v1599, %v1668
    %v1670 = vpop.f32.mrb[0].mxu0
    %1671 = vdwg.mxu0
    %1672 = vmatprep.subr.mxu0 %v90
    %1673 = vmatpush1.xpose.msra.mxu0 %v89
    %1674 = vmatprep.subr.mxu0 %v146
    %1675 = vmatpush1.xpose.msra.mxu0 %v145
    %1676 = vmatprep.subr.mxu0 0.0
    %1677 = vmatpush1.xpose.msra.mxu0 0.0
    %1678 = vmatprep.subr.mxu0 0.0
    %1679 = vmatpush1.xpose.msra.mxu0 0.0
    %1680 = vmatprep.subr.mxu0 0.0
    %1681 = vmatpush1.xpose.msra.mxu0 0.0
    %1682 = vmatprep.subr.mxu0 0.0
    %1683 = vmatpush1.xpose.msra.mxu0 0.0
    %1684 = vmatprep.subr.mxu0 0.0
    %1685 = vmatpush1.xpose.msra.mxu0 0.0
    %1686 = vmatprep.subr.mxu0 0.0
    %1687 = vmatpush1.xpose.msra.mxu0 0.0
    %1688 = vmatprep.subr.mxu0 0.0
    %1689 = vmatpush1.xpose.msra.mxu0 0.0
    %1690 = vmatprep.subr.mxu0 0.0
    %1691 = vmatpush1.xpose.msra.mxu0 0.0
    %1692 = vmatprep.subr.mxu0 0.0
    %1693 = vmatpush1.xpose.msra.mxu0 0.0
    %1694 = vmatprep.subr.mxu0 0.0
    %1695 = vmatpush1.xpose.msra.mxu0 0.0
    %1696 = vmatprep.subr.mxu0 0.0
    %1697 = vmatpush1.xpose.msra.mxu0 0.0
    %1698 = vmatprep.subr.mxu0 0.0
    %1699 = vmatpush1.xpose.msra.mxu0 0.0
    %1700 = vmatprep.subr.mxu0 0.0
    %1701 = vmatpush1.xpose.msra.mxu0 0.0
    %1702 = vmatprep.subr.mxu0 0.0
    %1703 = vmatpush1.xpose.msra.mxu0 0.0
    %1704 = vmatprep.subr.mxu0 0.0
    %1705 = vmatpush1.xpose.msra.mxu0 0.0
    %1706 = vmatprep.subr.mxu0 0.0
    %1707 = vmatpush1.xpose.msra.mxu0 0.0
    %1708 = vmatprep.subr.mxu0 0.0
    %1709 = vmatpush1.xpose.msra.mxu0 0.0
    %1710 = vmatprep.subr.mxu0 0.0
    %1711 = vmatpush1.xpose.msra.mxu0 0.0
    %1712 = vmatprep.subr.mxu0 0.0
    %1713 = vmatpush1.xpose.msra.mxu0 0.0
    %1714 = vmatprep.subr.mxu0 0.0
    %1715 = vmatpush1.xpose.msra.mxu0 0.0
    %1716 = vmatprep.subr.mxu0 0.0
    %1717 = vmatpush1.xpose.msra.mxu0 0.0
    %1718 = vmatprep.subr.mxu0 0.0
    %1719 = vmatpush1.xpose.msra.mxu0 0.0
    %1720 = vmatprep.subr.mxu0 0.0
    %1721 = vmatpush1.xpose.msra.mxu0 0.0
    %1722 = vmatprep.subr.mxu0 0.0
    %1723 = vmatpush1.xpose.msra.mxu0 0.0
    %1724 = vmatprep.subr.mxu0 0.0
    %1725 = vmatpush1.xpose.msra.mxu0 0.0
    %1726 = vmatprep.subr.mxu0 0.0
    %1727 = vmatpush1.xpose.msra.mxu0 0.0
    %1728 = vmatprep.subr.mxu0 0.0
    %1729 = vmatpush1.xpose.msra.mxu0 0.0
    %1730 = vmatprep.subr.mxu0 0.0
    %1731 = vmatpush1.xpose.msra.mxu0 0.0
    %1732 = vmatprep.subr.mxu0 0.0
    %1733 = vmatpush1.xpose.msra.mxu0 0.0
    %1734 = vmatprep.subr.mxu0 0.0
    %1735 = vmatpush1.xpose.msra.mxu0 0.0
    %1736 = vmatprep.mubr.f32.mxu0 %v340
    %1737 = vmatmul.mubr.f32.gmra.mrb[0].mxu0 %v338
    %v1738 = vpop.f32.mrb[0].mxu0
    %v1739 = vadd.f32 %v1669, %v1738
    %v1740 = vpop.f32.mrb[0].mxu0
    %1741 = vdwg.mxu0
    %1742 = vmatprep.subr.mxu0 %v92
    %1743 = vmatpush1.xpose.msra.mxu0 %v91
    %1744 = vmatprep.subr.mxu0 %v148
    %1745 = vmatpush1.xpose.msra.mxu0 %v147
    %1746 = vmatprep.subr.mxu0 0.0
    %1747 = vmatpush1.xpose.msra.mxu0 0.0
    %1748 = vmatprep.subr.mxu0 0.0
    %1749 = vmatpush1.xpose.msra.mxu0 0.0
    %1750 = vmatprep.subr.mxu0 0.0
    %1751 = vmatpush1.xpose.msra.mxu0 0.0
    %1752 = vmatprep.subr.mxu0 0.0
    %1753 = vmatpush1.xpose.msra.mxu0 0.0
    %1754 = vmatprep.subr.mxu0 0.0
    %1755 = vmatpush1.xpose.msra.mxu0 0.0
    %1756 = vmatprep.subr.mxu0 0.0
    %1757 = vmatpush1.xpose.msra.mxu0 0.0
    %1758 = vmatprep.subr.mxu0 0.0
    %1759 = vmatpush1.xpose.msra.mxu0 0.0
    %1760 = vmatprep.subr.mxu0 0.0
    %1761 = vmatpush1.xpose.msra.mxu0 0.0
    %1762 = vmatprep.subr.mxu0 0.0
    %1763 = vmatpush1.xpose.msra.mxu0 0.0
    %1764 = vmatprep.subr.mxu0 0.0
    %1765 = vmatpush1.xpose.msra.mxu0 0.0
    %1766 = vmatprep.subr.mxu0 0.0
    %1767 = vmatpush1.xpose.msra.mxu0 0.0
    %1768 = vmatprep.subr.mxu0 0.0
    %1769 = vmatpush1.xpose.msra.mxu0 0.0
    %1770 = vmatprep.subr.mxu0 0.0
    %1771 = vmatpush1.xpose.msra.mxu0 0.0
    %1772 = vmatprep.subr.mxu0 0.0
    %1773 = vmatpush1.xpose.msra.mxu0 0.0
    %1774 = vmatprep.subr.mxu0 0.0
    %1775 = vmatpush1.xpose.msra.mxu0 0.0
    %1776 = vmatprep.subr.mxu0 0.0
    %1777 = vmatpush1.xpose.msra.mxu0 0.0
    %1778 = vmatprep.subr.mxu0 0.0
    %1779 = vmatpush1.xpose.msra.mxu0 0.0
    %1780 = vmatprep.subr.mxu0 0.0
    %1781 = vmatpush1.xpose.msra.mxu0 0.0
    %1782 = vmatprep.subr.mxu0 0.0
    %1783 = vmatpush1.xpose.msra.mxu0 0.0
    %1784 = vmatprep.subr.mxu0 0.0
    %1785 = vmatpush1.xpose.msra.mxu0 0.0
    %1786 = vmatprep.subr.mxu0 0.0
    %1787 = vmatpush1.xpose.msra.mxu0 0.0
    %1788 = vmatprep.subr.mxu0 0.0
    %1789 = vmatpush1.xpose.msra.mxu0 0.0
    %1790 = vmatprep.subr.mxu0 0.0
    %1791 = vmatpush1.xpose.msra.mxu0 0.0
    %1792 = vmatprep.subr.mxu0 0.0
    %1793 = vmatpush1.xpose.msra.mxu0 0.0
    %1794 = vmatprep.subr.mxu0 0.0
    %1795 = vmatpush1.xpose.msra.mxu0 0.0
    %1796 = vmatprep.subr.mxu0 0.0
    %1797 = vmatpush1.xpose.msra.mxu0 0.0
    %1798 = vmatprep.subr.mxu0 0.0
    %1799 = vmatpush1.xpose.msra.mxu0 0.0
    %1800 = vmatprep.subr.mxu0 0.0
    %1801 = vmatpush1.xpose.msra.mxu0 0.0
    %1802 = vmatprep.subr.mxu0 0.0
    %1803 = vmatpush1.xpose.msra.mxu0 0.0
    %1804 = vmatprep.subr.mxu0 0.0
    %1805 = vmatpush1.xpose.msra.mxu0 0.0
    %1806 = vmatprep.mubr.f32.mxu0 %v356
    %1807 = vmatmul.mubr.f32.gmra.mrb[0].mxu0 %v348
    %v1808 = vpop.f32.mrb[0].mxu0
    %v1809 = vadd.f32 %v1739, %v1808
    %v1810 = vpop.f32.mrb[0].mxu0
    %1811 = vdwg.mxu0
    %1812 = vmatprep.subr.mxu0 %v94
    %1813 = vmatpush1.xpose.msra.mxu0 %v93
    %1814 = vmatprep.subr.mxu0 %v150
    %1815 = vmatpush1.xpose.msra.mxu0 %v149
    %1816 = vmatprep.subr.mxu0 0.0
    %1817 = vmatpush1.xpose.msra.mxu0 0.0
    %1818 = vmatprep.subr.mxu0 0.0
    %1819 = vmatpush1.xpose.msra.mxu0 0.0
    %1820 = vmatprep.subr.mxu0 0.0
    %1821 = vmatpush1.xpose.msra.mxu0 0.0
    %1822 = vmatprep.subr.mxu0 0.0
    %1823 = vmatpush1.xpose.msra.mxu0 0.0
    %1824 = vmatprep.subr.mxu0 0.0
    %1825 = vmatpush1.xpose.msra.mxu0 0.0
    %1826 = vmatprep.subr.mxu0 0.0
    %1827 = vmatpush1.xpose.msra.mxu0 0.0
    %1828 = vmatprep.subr.mxu0 0.0
    %1829 = vmatpush1.xpose.msra.mxu0 0.0
    %1830 = vmatprep.subr.mxu0 0.0
    %1831 = vmatpush1.xpose.msra.mxu0 0.0
    %1832 = vmatprep.subr.mxu0 0.0
    %1833 = vmatpush1.xpose.msra.mxu0 0.0
    %1834 = vmatprep.subr.mxu0 0.0
    %1835 = vmatpush1.xpose.msra.mxu0 0.0
    %1836 = vmatprep.subr.mxu0 0.0
    %1837 = vmatpush1.xpose.msra.mxu0 0.0
    %1838 = vmatprep.subr.mxu0 0.0
    %1839 = vmatpush1.xpose.msra.mxu0 0.0
    %1840 = vmatprep.subr.mxu0 0.0
    %1841 = vmatpush1.xpose.msra.mxu0 0.0
    %1842 = vmatprep.subr.mxu0 0.0
    %1843 = vmatpush1.xpose.msra.mxu0 0.0
    %1844 = vmatprep.subr.mxu0 0.0
    %1845 = vmatpush1.xpose.msra.mxu0 0.0
    %1846 = vmatprep.subr.mxu0 0.0
    %1847 = vmatpush1.xpose.msra.mxu0 0.0
    %1848 = vmatprep.subr.mxu0 0.0
    %1849 = vmatpush1.xpose.msra.mxu0 0.0
    %1850 = vmatprep.subr.mxu0 0.0
    %1851 = vmatpush1.xpose.msra.mxu0 0.0
    %1852 = vmatprep.subr.mxu0 0.0
    %1853 = vmatpush1.xpose.msra.mxu0 0.0
    %1854 = vmatprep.subr.mxu0 0.0
    %1855 = vmatpush1.xpose.msra.mxu0 0.0
    %1856 = vmatprep.subr.mxu0 0.0
    %1857 = vmatpush1.xpose.msra.mxu0 0.0
    %1858 = vmatprep.subr.mxu0 0.0
    %1859 = vmatpush1.xpose.msra.mxu0 0.0
    %1860 = vmatprep.subr.mxu0 0.0
    %1861 = vmatpush1.xpose.msra.mxu0 0.0
    %1862 = vmatprep.subr.mxu0 0.0
    %1863 = vmatpush1.xpose.msra.mxu0 0.0
    %1864 = vmatprep.subr.mxu0 0.0
    %1865 = vmatpush1.xpose.msra.mxu0 0.0
    %1866 = vmatprep.subr.mxu0 0.0
    %1867 = vmatpush1.xpose.msra.mxu0 0.0
    %1868 = vmatprep.subr.mxu0 0.0
    %1869 = vmatpush1.xpose.msra.mxu0 0.0
    %1870 = vmatprep.subr.mxu0 0.0
    %1871 = vmatpush1.xpose.msra.mxu0 0.0
    %1872 = vmatprep.subr.mxu0 0.0
    %1873 = vmatpush1.xpose.msra.mxu0 0.0
    %1874 = vmatprep.subr.mxu0 0.0
    %1875 = vmatpush1.xpose.msra.mxu0 0.0
    %1876 = vmatprep.mubr.f32.mxu0 %v357
    %1877 = vmatmul.mubr.f32.gmra.mrb[0].mxu0 %v355
    %v1878 = vpop.f32.mrb[0].mxu0
    %v1879 = vadd.f32 %v1809, %v1878
    %v1880 = vpop.f32.mrb[0].mxu0
    %1881 = vdwg.mxu0
    %1882 = vmatprep.subr.mxu0 %v96
    %1883 = vmatpush1.xpose.msra.mxu0 %v95
    %1884 = vmatprep.subr.mxu0 %v152
    %1885 = vmatpush1.xpose.msra.mxu0 %v151
    %1886 = vmatprep.subr.mxu0 0.0
    %1887 = vmatpush1.xpose.msra.mxu0 0.0
    %1888 = vmatprep.subr.mxu0 0.0
    %1889 = vmatpush1.xpose.msra.mxu0 0.0
    %1890 = vmatprep.subr.mxu0 0.0
    %1891 = vmatpush1.xpose.msra.mxu0 0.0
    %1892 = vmatprep.subr.mxu0 0.0
    %1893 = vmatpush1.xpose.msra.mxu0 0.0
    %1894 = vmatprep.subr.mxu0 0.0
    %1895 = vmatpush1.xpose.msra.mxu0 0.0
    %1896 = vmatprep.subr.mxu0 0.0
    %1897 = vmatpush1.xpose.msra.mxu0 0.0
    %1898 = vmatprep.subr.mxu0 0.0
    %1899 = vmatpush1.xpose.msra.mxu0 0.0
    %1900 = vmatprep.subr.mxu0 0.0
    %1901 = vmatpush1.xpose.msra.mxu0 0.0
    %1902 = vmatprep.subr.mxu0 0.0
    %1903 = vmatpush1.xpose.msra.mxu0 0.0
    %1904 = vmatprep.subr.mxu0 0.0
    %1905 = vmatpush1.xpose.msra.mxu0 0.0
    %1906 = vmatprep.subr.mxu0 0.0
    %1907 = vmatpush1.xpose.msra.mxu0 0.0
    %1908 = vmatprep.subr.mxu0 0.0
    %1909 = vmatpush1.xpose.msra.mxu0 0.0
    %1910 = vmatprep.subr.mxu0 0.0
    %1911 = vmatpush1.xpose.msra.mxu0 0.0
    %1912 = vmatprep.subr.mxu0 0.0
    %1913 = vmatpush1.xpose.msra.mxu0 0.0
    %1914 = vmatprep.subr.mxu0 0.0
    %1915 = vmatpush1.xpose.msra.mxu0 0.0
    %1916 = vmatprep.subr.mxu0 0.0
    %1917 = vmatpush1.xpose.msra.mxu0 0.0
    %1918 = vmatprep.subr.mxu0 0.0
    %1919 = vmatpush1.xpose.msra.mxu0 0.0
    %1920 = vmatprep.subr.mxu0 0.0
    %1921 = vmatpush1.xpose.msra.mxu0 0.0
    %1922 = vmatprep.subr.mxu0 0.0
    %1923 = vmatpush1.xpose.msra.mxu0 0.0
    %1924 = vmatprep.subr.mxu0 0.0
    %1925 = vmatpush1.xpose.msra.mxu0 0.0
    %1926 = vmatprep.subr.mxu0 0.0
    %1927 = vmatpush1.xpose.msra.mxu0 0.0
    %1928 = vmatprep.subr.mxu0 0.0
    %1929 = vmatpush1.xpose.msra.mxu0 0.0
    %1930 = vmatprep.subr.mxu0 0.0
    %1931 = vmatpush1.xpose.msra.mxu0 0.0
    %1932 = vmatprep.subr.mxu0 0.0
    %1933 = vmatpush1.xpose.msra.mxu0 0.0
    %1934 = vmatprep.subr.mxu0 0.0
    %1935 = vmatpush1.xpose.msra.mxu0 0.0
    %1936 = vmatprep.subr.mxu0 0.0
    %1937 = vmatpush1.xpose.msra.mxu0 0.0
    %1938 = vmatprep.subr.mxu0 0.0
    %1939 = vmatpush1.xpose.msra.mxu0 0.0
    %1940 = vmatprep.subr.mxu0 0.0
    %1941 = vmatpush1.xpose.msra.mxu0 0.0
    %1942 = vmatprep.subr.mxu0 0.0
    %1943 = vmatpush1.xpose.msra.mxu0 0.0
    %1944 = vmatprep.subr.mxu0 0.0
    %1945 = vmatpush1.xpose.msra.mxu0 0.0
    %1946 = vmatprep.mubr.f32.mxu0 %v373
    %1947 = vmatmul.mubr.f32.gmra.mrb[0].mxu0 %v365
    %v1948 = vpop.f32.mrb[0].mxu0
    %v1949 = vadd.f32 %v1879, %v1948
    %v1950 = vpop.f32.mrb[0].mxu0
    %1951 = vdwg.mxu0
    %1952 = vmatprep.subr.mxu0 %v98
    %1953 = vmatpush1.xpose.msra.mxu0 %v97
    %1954 = vmatprep.subr.mxu0 %v154
    %1955 = vmatpush1.xpose.msra.mxu0 %v153
    %1956 = vmatprep.subr.mxu0 0.0
    %1957 = vmatpush1.xpose.msra.mxu0 0.0
    %1958 = vmatprep.subr.mxu0 0.0
    %1959 = vmatpush1.xpose.msra.mxu0 0.0
    %1960 = vmatprep.subr.mxu0 0.0
    %1961 = vmatpush1.xpose.msra.mxu0 0.0
    %1962 = vmatprep.subr.mxu0 0.0
    %1963 = vmatpush1.xpose.msra.mxu0 0.0
    %1964 = vmatprep.subr.mxu0 0.0
    %1965 = vmatpush1.xpose.msra.mxu0 0.0
    %1966 = vmatprep.subr.mxu0 0.0
    %1967 = vmatpush1.xpose.msra.mxu0 0.0
    %1968 = vmatprep.subr.mxu0 0.0
    %1969 = vmatpush1.xpose.msra.mxu0 0.0
    %1970 = vmatprep.subr.mxu0 0.0
    %1971 = vmatpush1.xpose.msra.mxu0 0.0
    %1972 = vmatprep.subr.mxu0 0.0
    %1973 = vmatpush1.xpose.msra.mxu0 0.0
    %1974 = vmatprep.subr.mxu0 0.0
    %1975 = vmatpush1.xpose.msra.mxu0 0.0
    %1976 = vmatprep.subr.mxu0 0.0
    %1977 = vmatpush1.xpose.msra.mxu0 0.0
    %1978 = vmatprep.subr.mxu0 0.0
    %1979 = vmatpush1.xpose.msra.mxu0 0.0
    %1980 = vmatprep.subr.mxu0 0.0
    %1981 = vmatpush1.xpose.msra.mxu0 0.0
    %1982 = vmatprep.subr.mxu0 0.0
    %1983 = vmatpush1.xpose.msra.mxu0 0.0
    %1984 = vmatprep.subr.mxu0 0.0
    %1985 = vmatpush1.xpose.msra.mxu0 0.0
    %1986 = vmatprep.subr.mxu0 0.0
    %1987 = vmatpush1.xpose.msra.mxu0 0.0
    %1988 = vmatprep.subr.mxu0 0.0
    %1989 = vmatpush1.xpose.msra.mxu0 0.0
    %1990 = vmatprep.subr.mxu0 0.0
    %1991 = vmatpush1.xpose.msra.mxu0 0.0
    %1992 = vmatprep.subr.mxu0 0.0
    %1993 = vmatpush1.xpose.msra.mxu0 0.0
    %1994 = vmatprep.subr.mxu0 0.0
    %1995 = vmatpush1.xpose.msra.mxu0 0.0
    %1996 = vmatprep.subr.mxu0 0.0
    %1997 = vmatpush1.xpose.msra.mxu0 0.0
    %1998 = vmatprep.subr.mxu0 0.0
    %1999 = vmatpush1.xpose.msra.mxu0 0.0
    %2000 = vmatprep.subr.mxu0 0.0
    %2001 = vmatpush1.xpose.msra.mxu0 0.0
    %2002 = vmatprep.subr.mxu0 0.0
    %2003 = vmatpush1.xpose.msra.mxu0 0.0
    %2004 = vmatprep.subr.mxu0 0.0
    %2005 = vmatpush1.xpose.msra.mxu0 0.0
    %2006 = vmatprep.subr.mxu0 0.0
    %2007 = vmatpush1.xpose.msra.mxu0 0.0
    %2008 = vmatprep.subr.mxu0 0.0
    %2009 = vmatpush1.xpose.msra.mxu0 0.0
    %2010 = vmatprep.subr.mxu0 0.0
    %2011 = vmatpush1.xpose.msra.mxu0 0.0
    %2012 = vmatprep.subr.mxu0 0.0
    %2013 = vmatpush1.xpose.msra.mxu0 0.0
    %2014 = vmatprep.subr.mxu0 0.0
    %2015 = vmatpush1.xpose.msra.mxu0 0.0
    %2016 = vmatprep.mubr.f32.mxu0 %v374
    %2017 = vmatmul.mubr.f32.gmra.mrb[0].mxu0 %v372
    %v2018 = vpop.f32.mrb[0].mxu0
    %v2019 = vadd.f32 %v1949, %v2018
    %v2020 = vpop.f32.mrb[0].mxu0
    %2021 = vdwg.mxu0
    %2022 = vmatprep.subr.mxu0 %v100
    %2023 = vmatpush1.xpose.msra.mxu0 %v99
    %2024 = vmatprep.subr.mxu0 %v156
    %2025 = vmatpush1.xpose.msra.mxu0 %v155
    %2026 = vmatprep.subr.mxu0 0.0
    %2027 = vmatpush1.xpose.msra.mxu0 0.0
    %2028 = vmatprep.subr.mxu0 0.0
    %2029 = vmatpush1.xpose.msra.mxu0 0.0
    %2030 = vmatprep.subr.mxu0 0.0
    %2031 = vmatpush1.xpose.msra.mxu0 0.0
    %2032 = vmatprep.subr.mxu0 0.0
    %2033 = vmatpush1.xpose.msra.mxu0 0.0
    %2034 = vmatprep.subr.mxu0 0.0
    %2035 = vmatpush1.xpose.msra.mxu0 0.0
    %2036 = vmatprep.subr.mxu0 0.0
    %2037 = vmatpush1.xpose.msra.mxu0 0.0
    %2038 = vmatprep.subr.mxu0 0.0
    %2039 = vmatpush1.xpose.msra.mxu0 0.0
    %2040 = vmatprep.subr.mxu0 0.0
    %2041 = vmatpush1.xpose.msra.mxu0 0.0
    %2042 = vmatprep.subr.mxu0 0.0
    %2043 = vmatpush1.xpose.msra.mxu0 0.0
    %2044 = vmatprep.subr.mxu0 0.0
    %2045 = vmatpush1.xpose.msra.mxu0 0.0
    %2046 = vmatprep.subr.mxu0 0.0
    %2047 = vmatpush1.xpose.msra.mxu0 0.0
    %2048 = vmatprep.subr.mxu0 0.0
    %2049 = vmatpush1.xpose.msra.mxu0 0.0
    %2050 = vmatprep.subr.mxu0 0.0
    %2051 = vmatpush1.xpose.msra.mxu0 0.0
    %2052 = vmatprep.subr.mxu0 0.0
    %2053 = vmatpush1.xpose.msra.mxu0 0.0
    %2054 = vmatprep.subr.mxu0 0.0
    %2055 = vmatpush1.xpose.msra.mxu0 0.0
    %2056 = vmatprep.subr.mxu0 0.0
    %2057 = vmatpush1.xpose.msra.mxu0 0.0
    %2058 = vmatprep.subr.mxu0 0.0
    %2059 = vmatpush1.xpose.msra.mxu0 0.0
    %2060 = vmatprep.subr.mxu0 0.0
    %2061 = vmatpush1.xpose.msra.mxu0 0.0
    %2062 = vmatprep.subr.mxu0 0.0
    %2063 = vmatpush1.xpose.msra.mxu0 0.0
    %2064 = vmatprep.subr.mxu0 0.0
    %2065 = vmatpush1.xpose.msra.mxu0 0.0
    %2066 = vmatprep.subr.mxu0 0.0
    %2067 = vmatpush1.xpose.msra.mxu0 0.0
    %2068 = vmatprep.subr.mxu0 0.0
    %2069 = vmatpush1.xpose.msra.mxu0 0.0
    %2070 = vmatprep.subr.mxu0 0.0
    %2071 = vmatpush1.xpose.msra.mxu0 0.0
    %2072 = vmatprep.subr.mxu0 0.0
    %2073 = vmatpush1.xpose.msra.mxu0 0.0
    %2074 = vmatprep.subr.mxu0 0.0
    %2075 = vmatpush1.xpose.msra.mxu0 0.0
    %2076 = vmatprep.subr.mxu0 0.0
    %2077 = vmatpush1.xpose.msra.mxu0 0.0
    %2078 = vmatprep.subr.mxu0 0.0
    %2079 = vmatpush1.xpose.msra.mxu0 0.0
    %2080 = vmatprep.subr.mxu0 0.0
    %2081 = vmatpush1.xpose.msra.mxu0 0.0
    %2082 = vmatprep.subr.mxu0 0.0
    %2083 = vmatpush1.xpose.msra.mxu0 0.0
    %2084 = vmatprep.subr.mxu0 0.0
    %2085 = vmatpush1.xpose.msra.mxu0 0.0
    %2086 = vmatprep.mubr.f32.mxu0 %v390
    %2087 = vmatmul.mubr.f32.gmra.mrb[0].mxu0 %v382
    %v2088 = vpop.f32.mrb[0].mxu0
    %v2089 = vadd.f32 %v2019, %v2088
    %v2090 = vpop.f32.mrb[0].mxu0
    %2091 = vdwg.mxu0
    %2092 = vmatprep.subr.mxu0 %v102
    %2093 = vmatpush1.xpose.msra.mxu0 %v101
    %2094 = vmatprep.subr.mxu0 %v158
    %2095 = vmatpush1.xpose.msra.mxu0 %v157
    %2096 = vmatprep.subr.mxu0 0.0
    %2097 = vmatpush1.xpose.msra.mxu0 0.0
    %2098 = vmatprep.subr.mxu0 0.0
    %2099 = vmatpush1.xpose.msra.mxu0 0.0
    %2100 = vmatprep.subr.mxu0 0.0
    %2101 = vmatpush1.xpose.msra.mxu0 0.0
    %2102 = vmatprep.subr.mxu0 0.0
    %2103 = vmatpush1.xpose.msra.mxu0 0.0
    %2104 = vmatprep.subr.mxu0 0.0
    %2105 = vmatpush1.xpose.msra.mxu0 0.0
    %2106 = vmatprep.subr.mxu0 0.0
    %2107 = vmatpush1.xpose.msra.mxu0 0.0
    %2108 = vmatprep.subr.mxu0 0.0
    %2109 = vmatpush1.xpose.msra.mxu0 0.0
    %2110 = vmatprep.subr.mxu0 0.0
    %2111 = vmatpush1.xpose.msra.mxu0 0.0
    %2112 = vmatprep.subr.mxu0 0.0
    %2113 = vmatpush1.xpose.msra.mxu0 0.0
    %2114 = vmatprep.subr.mxu0 0.0
    %2115 = vmatpush1.xpose.msra.mxu0 0.0
    %2116 = vmatprep.subr.mxu0 0.0
    %2117 = vmatpush1.xpose.msra.mxu0 0.0
    %2118 = vmatprep.subr.mxu0 0.0
    %2119 = vmatpush1.xpose.msra.mxu0 0.0
    %2120 = vmatprep.subr.mxu0 0.0
    %2121 = vmatpush1.xpose.msra.mxu0 0.0
    %2122 = vmatprep.subr.mxu0 0.0
    %2123 = vmatpush1.xpose.msra.mxu0 0.0
    %2124 = vmatprep.subr.mxu0 0.0
    %2125 = vmatpush1.xpose.msra.mxu0 0.0
    %2126 = vmatprep.subr.mxu0 0.0
    %2127 = vmatpush1.xpose.msra.mxu0 0.0
    %2128 = vmatprep.subr.mxu0 0.0
    %2129 = vmatpush1.xpose.msra.mxu0 0.0
    %2130 = vmatprep.subr.mxu0 0.0
    %2131 = vmatpush1.xpose.msra.mxu0 0.0
    %2132 = vmatprep.subr.mxu0 0.0
    %2133 = vmatpush1.xpose.msra.mxu0 0.0
    %2134 = vmatprep.subr.mxu0 0.0
    %2135 = vmatpush1.xpose.msra.mxu0 0.0
    %2136 = vmatprep.subr.mxu0 0.0
    %2137 = vmatpush1.xpose.msra.mxu0 0.0
    %2138 = vmatprep.subr.mxu0 0.0
    %2139 = vmatpush1.xpose.msra.mxu0 0.0
    %2140 = vmatprep.subr.mxu0 0.0
    %2141 = vmatpush1.xpose.msra.mxu0 0.0
    %2142 = vmatprep.subr.mxu0 0.0
    %2143 = vmatpush1.xpose.msra.mxu0 0.0
    %2144 = vmatprep.subr.mxu0 0.0
    %2145 = vmatpush1.xpose.msra.mxu0 0.0
    %2146 = vmatprep.subr.mxu0 0.0
    %2147 = vmatpush1.xpose.msra.mxu0 0.0
    %2148 = vmatprep.subr.mxu0 0.0
    %2149 = vmatpush1.xpose.msra.mxu0 0.0
    %2150 = vmatprep.subr.mxu0 0.0
    %2151 = vmatpush1.xpose.msra.mxu0 0.0
    %2152 = vmatprep.subr.mxu0 0.0
    %2153 = vmatpush1.xpose.msra.mxu0 0.0
    %2154 = vmatprep.subr.mxu0 0.0
    %2155 = vmatpush1.xpose.msra.mxu0 0.0
    %2156 = vmatprep.mubr.f32.mxu0 %v391
    %2157 = vmatmul.mubr.f32.gmra.mrb[0].mxu0 %v389
    %v2158 = vpop.f32.mrb[0].mxu0
    %v2159 = vadd.f32 %v2089, %v2158
    %v2160 = vpop.f32.mrb[0].mxu0
    %2161 = vdwg.mxu0
    %2162 = vmatprep.subr.mxu0 %v104
    %2163 = vmatpush1.xpose.msra.mxu0 %v103
    %2164 = vmatprep.subr.mxu0 %v160
    %2165 = vmatpush1.xpose.msra.mxu0 %v159
    %2166 = vmatprep.subr.mxu0 0.0
    %2167 = vmatpush1.xpose.msra.mxu0 0.0
    %2168 = vmatprep.subr.mxu0 0.0
    %2169 = vmatpush1.xpose.msra.mxu0 0.0
    %2170 = vmatprep.subr.mxu0 0.0
    %2171 = vmatpush1.xpose.msra.mxu0 0.0
    %2172 = vmatprep.subr.mxu0 0.0
    %2173 = vmatpush1.xpose.msra.mxu0 0.0
    %2174 = vmatprep.subr.mxu0 0.0
    %2175 = vmatpush1.xpose.msra.mxu0 0.0
    %2176 = vmatprep.subr.mxu0 0.0
    %2177 = vmatpush1.xpose.msra.mxu0 0.0
    %2178 = vmatprep.subr.mxu0 0.0
    %2179 = vmatpush1.xpose.msra.mxu0 0.0
    %2180 = vmatprep.subr.mxu0 0.0
    %2181 = vmatpush1.xpose.msra.mxu0 0.0
    %2182 = vmatprep.subr.mxu0 0.0
    %2183 = vmatpush1.xpose.msra.mxu0 0.0
    %2184 = vmatprep.subr.mxu0 0.0
    %2185 = vmatpush1.xpose.msra.mxu0 0.0
    %2186 = vmatprep.subr.mxu0 0.0
    %2187 = vmatpush1.xpose.msra.mxu0 0.0
    %2188 = vmatprep.subr.mxu0 0.0
    %2189 = vmatpush1.xpose.msra.mxu0 0.0
    %2190 = vmatprep.subr.mxu0 0.0
    %2191 = vmatpush1.xpose.msra.mxu0 0.0
    %2192 = vmatprep.subr.mxu0 0.0
    %2193 = vmatpush1.xpose.msra.mxu0 0.0
    %2194 = vmatprep.subr.mxu0 0.0
    %2195 = vmatpush1.xpose.msra.mxu0 0.0
    %2196 = vmatprep.subr.mxu0 0.0
    %2197 = vmatpush1.xpose.msra.mxu0 0.0
    %2198 = vmatprep.subr.mxu0 0.0
    %2199 = vmatpush1.xpose.msra.mxu0 0.0
    %2200 = vmatprep.subr.mxu0 0.0
    %2201 = vmatpush1.xpose.msra.mxu0 0.0
    %2202 = vmatprep.subr.mxu0 0.0
    %2203 = vmatpush1.xpose.msra.mxu0 0.0
    %2204 = vmatprep.subr.mxu0 0.0
    %2205 = vmatpush1.xpose.msra.mxu0 0.0
    %2206 = vmatprep.subr.mxu0 0.0
    %2207 = vmatpush1.xpose.msra.mxu0 0.0
    %2208 = vmatprep.subr.mxu0 0.0
    %2209 = vmatpush1.xpose.msra.mxu0 0.0
    %2210 = vmatprep.subr.mxu0 0.0
    %2211 = vmatpush1.xpose.msra.mxu0 0.0
    %2212 = vmatprep.subr.mxu0 0.0
    %2213 = vmatpush1.xpose.msra.mxu0 0.0
    %2214 = vmatprep.subr.mxu0 0.0
    %2215 = vmatpush1.xpose.msra.mxu0 0.0
    %2216 = vmatprep.subr.mxu0 0.0
    %2217 = vmatpush1.xpose.msra.mxu0 0.0
    %2218 = vmatprep.subr.mxu0 0.0
    %2219 = vmatpush1.xpose.msra.mxu0 0.0
    %2220 = vmatprep.subr.mxu0 0.0
    %2221 = vmatpush1.xpose.msra.mxu0 0.0
    %2222 = vmatprep.subr.mxu0 0.0
    %2223 = vmatpush1.xpose.msra.mxu0 0.0
    %2224 = vmatprep.subr.mxu0 0.0
    %2225 = vmatpush1.xpose.msra.mxu0 0.0
    %2226 = vmatprep.mubr.f32.mxu0 %v407
    %2227 = vmatmul.mubr.f32.gmra.mrb[0].mxu0 %v399
    %v2228 = vpop.f32.mrb[0].mxu0
    %v2229 = vadd.f32 %v2159, %v2228
    %v2230 = vpop.f32.mrb[0].mxu0
    %2231 = vdwg.mxu0
    %2232 = vmatprep.subr.mxu0 %v106
    %2233 = vmatpush1.xpose.msra.mxu0 %v105
    %2234 = vmatprep.subr.mxu0 %v162
    %2235 = vmatpush1.xpose.msra.mxu0 %v161
    %2236 = vmatprep.subr.mxu0 0.0
    %2237 = vmatpush1.xpose.msra.mxu0 0.0
    %2238 = vmatprep.subr.mxu0 0.0
    %2239 = vmatpush1.xpose.msra.mxu0 0.0
    %2240 = vmatprep.subr.mxu0 0.0
    %2241 = vmatpush1.xpose.msra.mxu0 0.0
    %2242 = vmatprep.subr.mxu0 0.0
    %2243 = vmatpush1.xpose.msra.mxu0 0.0
    %2244 = vmatprep.subr.mxu0 0.0
    %2245 = vmatpush1.xpose.msra.mxu0 0.0
    %2246 = vmatprep.subr.mxu0 0.0
    %2247 = vmatpush1.xpose.msra.mxu0 0.0
    %2248 = vmatprep.subr.mxu0 0.0
    %2249 = vmatpush1.xpose.msra.mxu0 0.0
    %2250 = vmatprep.subr.mxu0 0.0
    %2251 = vmatpush1.xpose.msra.mxu0 0.0
    %2252 = vmatprep.subr.mxu0 0.0
    %2253 = vmatpush1.xpose.msra.mxu0 0.0
    %2254 = vmatprep.subr.mxu0 0.0
    %2255 = vmatpush1.xpose.msra.mxu0 0.0
    %2256 = vmatprep.subr.mxu0 0.0
    %2257 = vmatpush1.xpose.msra.mxu0 0.0
    %2258 = vmatprep.subr.mxu0 0.0
    %2259 = vmatpush1.xpose.msra.mxu0 0.0
    %2260 = vmatprep.subr.mxu0 0.0
    %2261 = vmatpush1.xpose.msra.mxu0 0.0
    %2262 = vmatprep.subr.mxu0 0.0
    %2263 = vmatpush1.xpose.msra.mxu0 0.0
    %2264 = vmatprep.subr.mxu0 0.0
    %2265 = vmatpush1.xpose.msra.mxu0 0.0
    %2266 = vmatprep.subr.mxu0 0.0
    %2267 = vmatpush1.xpose.msra.mxu0 0.0
    %2268 = vmatprep.subr.mxu0 0.0
    %2269 = vmatpush1.xpose.msra.mxu0 0.0
    %2270 = vmatprep.subr.mxu0 0.0
    %2271 = vmatpush1.xpose.msra.mxu0 0.0
    %2272 = vmatprep.subr.mxu0 0.0
    %2273 = vmatpush1.xpose.msra.mxu0 0.0
    %2274 = vmatprep.subr.mxu0 0.0
    %2275 = vmatpush1.xpose.msra.mxu0 0.0
    %2276 = vmatprep.subr.mxu0 0.0
    %2277 = vmatpush1.xpose.msra.mxu0 0.0
    %2278 = vmatprep.subr.mxu0 0.0
    %2279 = vmatpush1.xpose.msra.mxu0 0.0
    %2280 = vmatprep.subr.mxu0 0.0
    %2281 = vmatpush1.xpose.msra.mxu0 0.0
    %2282 = vmatprep.subr.mxu0 0.0
    %2283 = vmatpush1.xpose.msra.mxu0 0.0
    %2284 = vmatprep.subr.mxu0 0.0
    %2285 = vmatpush1.xpose.msra.mxu0 0.0
    %2286 = vmatprep.subr.mxu0 0.0
    %2287 = vmatpush1.xpose.msra.mxu0 0.0
    %2288 = vmatprep.subr.mxu0 0.0
    %2289 = vmatpush1.xpose.msra.mxu0 0.0
    %2290 = vmatprep.subr.mxu0 0.0
    %2291 = vmatpush1.xpose.msra.mxu0 0.0
    %2292 = vmatprep.subr.mxu0 0.0
    %2293 = vmatpush1.xpose.msra.mxu0 0.0
    %2294 = vmatprep.subr.mxu0 0.0
    %2295 = vmatpush1.xpose.msra.mxu0 0.0
    %2296 = vmatprep.mubr.f32.mxu0 %v408
    %2297 = vmatmul.mubr.f32.gmra.mrb[0].mxu0 %v406
    %v2298 = vpop.f32.mrb[0].mxu0
    %v2299 = vadd.f32 %v2229, %v2298
    %v2300 = vpop.f32.mrb[0].mxu0
    %2301 = vdwg.mxu0
    %2302 = vmatprep.subr.mxu0 %v108
    %2303 = vmatpush1.xpose.msra.mxu0 %v107
    %2304 = vmatprep.subr.mxu0 %v164
    %2305 = vmatpush1.xpose.msra.mxu0 %v163
    %2306 = vmatprep.subr.mxu0 0.0
    %2307 = vmatpush1.xpose.msra.mxu0 0.0
    %2308 = vmatprep.subr.mxu0 0.0
    %2309 = vmatpush1.xpose.msra.mxu0 0.0
    %2310 = vmatprep.subr.mxu0 0.0
    %2311 = vmatpush1.xpose.msra.mxu0 0.0
    %2312 = vmatprep.subr.mxu0 0.0
    %2313 = vmatpush1.xpose.msra.mxu0 0.0
    %2314 = vmatprep.subr.mxu0 0.0
    %2315 = vmatpush1.xpose.msra.mxu0 0.0
    %2316 = vmatprep.subr.mxu0 0.0
    %2317 = vmatpush1.xpose.msra.mxu0 0.0
    %2318 = vmatprep.subr.mxu0 0.0
    %2319 = vmatpush1.xpose.msra.mxu0 0.0
    %2320 = vmatprep.subr.mxu0 0.0
    %2321 = vmatpush1.xpose.msra.mxu0 0.0
    %2322 = vmatprep.subr.mxu0 0.0
    %2323 = vmatpush1.xpose.msra.mxu0 0.0
    %2324 = vmatprep.subr.mxu0 0.0
    %2325 = vmatpush1.xpose.msra.mxu0 0.0
    %2326 = vmatprep.subr.mxu0 0.0
    %2327 = vmatpush1.xpose.msra.mxu0 0.0
    %2328 = vmatprep.subr.mxu0 0.0
    %2329 = vmatpush1.xpose.msra.mxu0 0.0
    %2330 = vmatprep.subr.mxu0 0.0
    %2331 = vmatpush1.xpose.msra.mxu0 0.0
    %2332 = vmatprep.subr.mxu0 0.0
    %2333 = vmatpush1.xpose.msra.mxu0 0.0
    %2334 = vmatprep.subr.mxu0 0.0
    %2335 = vmatpush1.xpose.msra.mxu0 0.0
    %2336 = vmatprep.subr.mxu0 0.0
    %2337 = vmatpush1.xpose.msra.mxu0 0.0
    %2338 = vmatprep.subr.mxu0 0.0
    %2339 = vmatpush1.xpose.msra.mxu0 0.0
    %2340 = vmatprep.subr.mxu0 0.0
    %2341 = vmatpush1.xpose.msra.mxu0 0.0
    %2342 = vmatprep.subr.mxu0 0.0
    %2343 = vmatpush1.xpose.msra.mxu0 0.0
    %2344 = vmatprep.subr.mxu0 0.0
    %2345 = vmatpush1.xpose.msra.mxu0 0.0
    %2346 = vmatprep.subr.mxu0 0.0
    %2347 = vmatpush1.xpose.msra.mxu0 0.0
    %2348 = vmatprep.subr.mxu0 0.0
    %2349 = vmatpush1.xpose.msra.mxu0 0.0
    %2350 = vmatprep.subr.mxu0 0.0
    %2351 = vmatpush1.xpose.msra.mxu0 0.0
    %2352 = vmatprep.subr.mxu0 0.0
    %2353 = vmatpush1.xpose.msra.mxu0 0.0
    %2354 = vmatprep.subr.mxu0 0.0
    %2355 = vmatpush1.xpose.msra.mxu0 0.0
    %2356 = vmatprep.subr.mxu0 0.0
    %2357 = vmatpush1.xpose.msra.mxu0 0.0
    %2358 = vmatprep.subr.mxu0 0.0
    %2359 = vmatpush1.xpose.msra.mxu0 0.0
    %2360 = vmatprep.subr.mxu0 0.0
    %2361 = vmatpush1.xpose.msra.mxu0 0.0
    %2362 = vmatprep.subr.mxu0 0.0
    %2363 = vmatpush1.xpose.msra.mxu0 0.0
    %2364 = vmatprep.subr.mxu0 0.0
    %2365 = vmatpush1.xpose.msra.mxu0 0.0
    %2366 = vmatprep.mubr.f32.mxu0 %v424
    %2367 = vmatmul.mubr.f32.gmra.mrb[0].mxu0 %v416
    %v2368 = vpop.f32.mrb[0].mxu0
    %v2369 = vadd.f32 %v2299, %v2368
    %v2370 = vpop.f32.mrb[0].mxu0
    %2371 = vdwg.mxu0
    %2372 = vmatprep.subr.mxu0 %v110
    %2373 = vmatpush1.xpose.msra.mxu0 %v109
    %2374 = vmatprep.subr.mxu0 %v166
    %2375 = vmatpush1.xpose.msra.mxu0 %v165
    %2376 = vmatprep.subr.mxu0 0.0
    %2377 = vmatpush1.xpose.msra.mxu0 0.0
    %2378 = vmatprep.subr.mxu0 0.0
    %2379 = vmatpush1.xpose.msra.mxu0 0.0
    %2380 = vmatprep.subr.mxu0 0.0
    %2381 = vmatpush1.xpose.msra.mxu0 0.0
    %2382 = vmatprep.subr.mxu0 0.0
    %2383 = vmatpush1.xpose.msra.mxu0 0.0
    %2384 = vmatprep.subr.mxu0 0.0
    %2385 = vmatpush1.xpose.msra.mxu0 0.0
    %2386 = vmatprep.subr.mxu0 0.0
    %2387 = vmatpush1.xpose.msra.mxu0 0.0
    %2388 = vmatprep.subr.mxu0 0.0
    %2389 = vmatpush1.xpose.msra.mxu0 0.0
    %2390 = vmatprep.subr.mxu0 0.0
    %2391 = vmatpush1.xpose.msra.mxu0 0.0
    %2392 = vmatprep.subr.mxu0 0.0
    %2393 = vmatpush1.xpose.msra.mxu0 0.0
    %2394 = vmatprep.subr.mxu0 0.0
    %2395 = vmatpush1.xpose.msra.mxu0 0.0
    %2396 = vmatprep.subr.mxu0 0.0
    %2397 = vmatpush1.xpose.msra.mxu0 0.0
    %2398 = vmatprep.subr.mxu0 0.0
    %2399 = vmatpush1.xpose.msra.mxu0 0.0
    %2400 = vmatprep.subr.mxu0 0.0
    %2401 = vmatpush1.xpose.msra.mxu0 0.0
    %2402 = vmatprep.subr.mxu0 0.0
    %2403 = vmatpush1.xpose.msra.mxu0 0.0
    %2404 = vmatprep.subr.mxu0 0.0
    %2405 = vmatpush1.xpose.msra.mxu0 0.0
    %2406 = vmatprep.subr.mxu0 0.0
    %2407 = vmatpush1.xpose.msra.mxu0 0.0
    %2408 = vmatprep.subr.mxu0 0.0
    %2409 = vmatpush1.xpose.msra.mxu0 0.0
    %2410 = vmatprep.subr.mxu0 0.0
    %2411 = vmatpush1.xpose.msra.mxu0 0.0
    %2412 = vmatprep.subr.mxu0 0.0
    %2413 = vmatpush1.xpose.msra.mxu0 0.0
    %2414 = vmatprep.subr.mxu0 0.0
    %2415 = vmatpush1.xpose.msra.mxu0 0.0
    %2416 = vmatprep.subr.mxu0 0.0
    %2417 = vmatpush1.xpose.msra.mxu0 0.0
    %2418 = vmatprep.subr.mxu0 0.0
    %2419 = vmatpush1.xpose.msra.mxu0 0.0
    %2420 = vmatprep.subr.mxu0 0.0
    %2421 = vmatpush1.xpose.msra.mxu0 0.0
    %2422 = vmatprep.subr.mxu0 0.0
    %2423 = vmatpush1.xpose.msra.mxu0 0.0
    %2424 = vmatprep.subr.mxu0 0.0
    %2425 = vmatpush1.xpose.msra.mxu0 0.0
    %2426 = vmatprep.subr.mxu0 0.0
    %2427 = vmatpush1.xpose.msra.mxu0 0.0
    %2428 = vmatprep.subr.mxu0 0.0
    %2429 = vmatpush1.xpose.msra.mxu0 0.0
    %2430 = vmatprep.subr.mxu0 0.0
    %2431 = vmatpush1.xpose.msra.mxu0 0.0
    %2432 = vmatprep.subr.mxu0 0.0
    %2433 = vmatpush1.xpose.msra.mxu0 0.0
    %2434 = vmatprep.subr.mxu0 0.0
    %2435 = vmatpush1.xpose.msra.mxu0 0.0
    %2436 = vmatprep.mubr.f32.mxu0 %v425
    %2437 = vmatmul.mubr.f32.gmra.mrb[0].mxu0 %v423
    %v2438 = vpop.f32.mrb[0].mxu0
    %v2439 = vadd.f32 %v2369, %v2438
    %v2440 = vpop.f32.mrb[0].mxu0
    %2441 = vdwg.mxu0
    %vm2442 = vcmask 74752
    %v2443 = vsel %vm2442, %v2439, -inf
    %2444 = vmax.xlane.f32.xlu0 %v2443
    %v2445 = vpop.xlane.xlu0 %2444
    %v2446 = vsub.f32 %v2439, %v2445
    %v2447 = vmul.f32 %v2446, 1.442695
    %v2448 = vpow.pop %v2447
    %v2449 = vsel %vm2442, %v2448, 0.0
    %2450 = vadd.xlane.f32.xlu0 %v2449
    %v2451 = vpop.xlane.xlu0 %2450
    %v2452 = vrcp.pop %v2451
    %v2453 = vmul.f32 %v2448, %v2452
    %2454 = vst.msk [vmem:[#allocation7] sm:$0x3] %vm2442, %v2453
    // Predicated region
    $region22: #{tpu_custom_call.1} parent=1 // pred_check
      _
    $region23: #{tpu_custom_call.1} parent=1 // pred_check_branch
      %2456 = sbr.rel (0) target = $region25
    $region24: #{tpu_custom_call.1} parent=1 // pred_region
      %s2458 = ssub.s32 32, 32
      %2459 = vsyncadd [#allocation4], %s2458
      %s2461 = sshll.u32 [#allocation7], 4
      %s2462 = int_to_ptr.vmem [resolvable:$true] %s2461
      %2464 = dma.vmem_to_hbm [thread:$0]  %s2462, 32, %s3, [#allocation4]
    $region25: #{tpu_custom_call.1} parent=1 // pred_fallthru
      _
    // Predicated region
    $region26: #{tpu_custom_call.1} parent=1 // pred_check
      _
    $region27: #{tpu_custom_call.1} parent=1 // pred_check_branch
      %2466 = sbr.rel (0) target = $region29
    $region28: #{tpu_custom_call.1} parent=1 // pred_region
      %2467 = dma.done [#allocation4], 32
    $region29: #{tpu_custom_call.1} parent=1 // pred_fallthru
      _
    %2468 = vsyncpa [#allocation3], 1
    %2469 = vsyncpa [#allocation6], 1
    %2470 = vsyncpa [#allocation4], 1

</llo_original>
